<compile_context>
chip_gen: v6e
topology: v6e:2x2x1
jax: 0.10.0
libtpu: 0.0.40
codegen_flags: <defaults>
</compile_context>

<pallas_src>
import jax
import jax.numpy as jnp
from jax.experimental import pallas as pl
from jax.experimental.pallas import tpu as pltpu

EPS = 1e-5


def _linknet_up_kernel(x_ref, w1_ref, t1_ref, w2a_ref, w2b_ref, t2_ref,
                       w3_ref, t3_ref, o_ref):
    # x_ref block:  (tile_r * W, Cin)      -- tile_r full image rows of W pixels
    # o_ref block:  (tile_r, 2, W, 2*Cout) -- (row, kh, w, (kw, cout))
    tile_r, _, w, two_cout = o_ref.shape

    # cbr1: 1x1 conv (BN scale pre-folded into w1) + shift + ReLU
    a = jnp.dot(x_ref[...], w1_ref[...], preferred_element_type=jnp.float32)
    a = jnp.maximum(a + t1_ref[...], 0.0).astype(w2a_ref.dtype)

    # dcbr2 + cbr3, one output-row parity (kh) at a time. Each kh produces a full
    # (tile_r, W, 2*Cout) slab written with a single wide store (no masked
    # sub-Cout stores, no lane-unaligned slicing of intermediates).
    for kh, w2_ref in enumerate((w2a_ref, w2b_ref)):
        # deconv contribution for this kh: columns ordered (kw, c)
        y = jnp.dot(a, w2_ref[...], preferred_element_type=jnp.float32)
        y = jnp.maximum(y + t2_ref[...], 0.0).astype(w3_ref.dtype)
        # cbr3 via block-diagonal weight: both kw sub-positions in one dot
        z = jnp.dot(y, w3_ref[...], preferred_element_type=jnp.float32)
        z = jnp.maximum(z + t3_ref[...], 0.0)
        # (tile_r*W, 2*Cout) -> (tile_r, W, 2*Cout): leading-dim split only (free)
        o_ref[:, kh, :, :] = z.reshape(tile_r, w, two_cout).astype(o_ref.dtype)


def _bn_fold(bias, gamma, beta, mean, var):
    scale = gamma / jnp.sqrt(var + EPS)
    shift = (bias - mean) * scale + beta
    return scale, shift


def linknet_up_nhwc(x_nhwc, params, *, compute_dtype=jnp.bfloat16,
                    target_pixels=1024):
    """x_nhwc: (N, H, W, Cin). Returns (N, 2H, 2W, Cout). Fast (native) path."""
    N, H, W, Cin = x_nhwc.shape
    w1, w2, w3 = params["w1"], params["w2"], params["w3"]
    Ch = w1.shape[0]          # out_channels // 2
    Cout = w3.shape[0]
    out_dtype = x_nhwc.dtype

    s1, t1 = _bn_fold(params["b1"], params["g1"], params["be1"], params["m1"], params["v1"])
    s2, t2 = _bn_fold(params["b2"], params["g2"], params["be2"], params["m2"], params["v2"])
    s3, t3 = _bn_fold(params["b3"], params["g3"], params["be3"], params["m3"], params["v3"])

    # cbr1 weight: (Cin, Ch), BN scale folded into columns.
    w1m = jnp.transpose(w1[:, :, 0, 0], (1, 0)) * s1[None, :]

    # dcbr2: ConvTranspose2d weight (ci, co, kh, kw). One matrix per kh with
    # columns ordered (kw, co); BN scale folded per co.
    s2_cols = jnp.tile(s2, 2)
    w2a = jnp.transpose(w2[:, :, 0, :], (0, 2, 1)).reshape(Ch, 2 * Ch) * s2_cols[None, :]
    w2b = jnp.transpose(w2[:, :, 1, :], (0, 2, 1)).reshape(Ch, 2 * Ch) * s2_cols[None, :]

    # cbr3: block-diagonal (2*Ch, 2*Cout) so both kw sub-positions are one dot
    # and one lane-dense store; BN scale folded per cout.
    w3m = jnp.transpose(w3[:, :, 0, 0], (1, 0)) * s3[None, :]
    w3blk = jnp.kron(jnp.eye(2, dtype=w3m.dtype), w3m)

    t1r = t1[None, :].astype(jnp.float32)
    t2r = jnp.tile(t2, 2)[None, :].astype(jnp.float32)
    t3r = jnp.tile(t3, 2)[None, :].astype(jnp.float32)

    w1m = w1m.astype(compute_dtype)
    w2a = w2a.astype(compute_dtype)
    w2b = w2b.astype(compute_dtype)
    w3blk = w3blk.astype(compute_dtype)

    # Row tiling over the N*H image rows; each grid step processes tile_r full
    # rows of W pixels (~target_pixels rows of the flattened matmul). tile_r is a
    # multiple of 8 so the (tile_r*W, Cin) block stays (8,128)-friendly; keep
    # >= 2 grid steps when possible so v7x's 2 TensorCores can both work.
    NH = N * H
    tile_r = max(8, ((target_pixels + W - 1) // W) // 8 * 8)
    tile_r = min(tile_r, ((NH + 7) // 8) * 8)
    if NH >= 16:
        tile_r = min(tile_r, max(8, (NH // 2) // 8 * 8))
    NH_pad = ((NH + tile_r - 1) // tile_r) * tile_r
    grid = (NH_pad // tile_r,)

    # Free reshape from NHWC (no transpose); pad rows to a multiple of the tile.
    x2d = x_nhwc.reshape(NH * W, Cin).astype(compute_dtype)
    if NH_pad != NH:
        x2d = jnp.pad(x2d, ((0, (NH_pad - NH) * W), (0, 0)))

    full2 = lambda i: (0, 0)
    out = pl.pallas_call(
        _linknet_up_kernel,
        out_shape=jax.ShapeDtypeStruct((NH_pad, 2, W, 2 * Cout), out_dtype),
        grid_spec=pltpu.PrefetchScalarGridSpec(
            num_scalar_prefetch=0,
            grid=grid,
            in_specs=[
                pl.BlockSpec((tile_r * W, Cin), lambda i: (i, 0)),
                pl.BlockSpec((Cin, Ch), full2),
                pl.BlockSpec((1, Ch), full2),
                pl.BlockSpec((Ch, 2 * Ch), full2),
                pl.BlockSpec((Ch, 2 * Ch), full2),
                pl.BlockSpec((1, 2 * Ch), full2),
                pl.BlockSpec((2 * Ch, 2 * Cout), full2),
                pl.BlockSpec((1, 2 * Cout), full2),
            ],
            out_specs=pl.BlockSpec((tile_r, 2, W, 2 * Cout),
                                   lambda i: (i, 0, 0, 0)),
        ),
        compiler_params=pltpu.CompilerParams(
            dimension_semantics=("parallel",),
            vmem_limit_bytes=48 * 1024 * 1024,   # within v7x's 64 MiB physical VMEM
        ),
    )(x2d, w1m, t1r, w2a, w2b, t2r, w3blk, t3r)

    if NH_pad != NH:
        out = out[:NH]
    # (N*H, kh, W, (kw, cout)) flattens in exactly NHWC order -> free reshape.
    return out.reshape(N, 2 * H, 2 * W, Cout)


def linknet_up(x_nchw, params, **kwargs):
    """NCHW compatibility wrapper matching the PyTorch module interface.
    For best performance keep the surrounding network NHWC and call
    linknet_up_nhwc directly (avoids the two boundary transposes)."""
    x_nhwc = jnp.transpose(x_nchw, (0, 2, 3, 1))
    out_nhwc = linknet_up_nhwc(x_nhwc, params, **kwargs)
    return jnp.transpose(out_nhwc, (0, 3, 1, 2))


def _reference(x_nchw, params):
    """Pure-JAX reference (same math, no Pallas) for verification."""
    def bn_relu(y_nchw, b, g, be, m, v):
        s = g / jnp.sqrt(v + EPS)
        t = (b - m) * s + be
        y = y_nchw * s[None, :, None, None] + t[None, :, None, None]
        return jnp.maximum(y, 0.0)

    w1, w2, w3 = params["w1"], params["w2"], params["w3"]
    # cbr1: 1x1 conv
    a = jnp.einsum("nchw,oc->nohw", x_nchw, w1[:, :, 0, 0])
    a = bn_relu(a, params["b1"], params["g1"], params["be1"], params["m1"], params["v1"])
    # dcbr2: ConvTranspose2d k=2, s=2, p=0
    N, Ch, H, W = a.shape
    y = jnp.einsum("nchw,cokl->nohkwl", a, w2)             # (N, Ch, H, 2, W, 2)
    y = y.reshape(N, Ch, 2 * H, 2 * W)
    y = bn_relu(y, params["b2"], params["g2"], params["be2"], params["m2"], params["v2"])
    # cbr3: 1x1 conv
    z = jnp.einsum("nchw,oc->nohw", y, w3[:, :, 0, 0])
    z = bn_relu(z, params["b3"], params["g3"], params["be3"], params["m3"], params["v3"])
    return z


def make_params(key, in_channels, out_channels):
    half = int(out_channels / 2)
    out_channels = int(out_channels)
    ks = jax.random.split(key, 16)

    def bn(k, c):
        k1, k2, k3, k4 = jax.random.split(k, 4)
        return dict(
            g=jax.random.uniform(k1, (c,), jnp.float32, 0.5, 1.5),
            be=jax.random.normal(k2, (c,), jnp.float32) * 0.1,
            m=jax.random.normal(k3, (c,), jnp.float32) * 0.1,
            v=jax.random.uniform(k4, (c,), jnp.float32, 0.5, 1.5),
        )

    bn1, bn2, bn3 = bn(ks[10], half), bn(ks[11], half), bn(ks[12], out_channels)
    p = {
        "w1": jax.random.normal(ks[0], (half, in_channels, 1, 1), jnp.float32) * 0.2,
        "b1": jax.random.normal(ks[1], (half,), jnp.float32) * 0.1,
        "w2": jax.random.normal(ks[2], (half, half, 2, 2), jnp.float32) * 0.2,
        "b2": jax.random.normal(ks[3], (half,), jnp.float32) * 0.1,
        "w3": jax.random.normal(ks[4], (out_channels, half, 1, 1), jnp.float32) * 0.2,
        "b3": jax.random.normal(ks[5], (out_channels,), jnp.float32) * 0.1,
    }
    for name, d in (("1", bn1), ("2", bn2), ("3", bn3)):
        for k, v in d.items():
            p[k + name] = v
    return p


if __name__ == "__main__":
    key = jax.random.PRNGKey(0)
    k_x, k_p = jax.random.split(key)

    in_channels, out_channels = 8, 8   # -> half = 4
    N, H, W = 2, 16, 16
    x = jax.random.normal(k_x, (N, in_channels, H, W), jnp.float32)
    params = make_params(k_p, in_channels, out_channels)

    ref = _reference(x, params)

    # Exact-math path (f32 streaming): tight correctness check of the fusion.
    out_f32 = jax.block_until_ready(linknet_up(x, params, compute_dtype=jnp.float32))
    assert out_f32.shape == (N, int(out_channels), 2 * H, 2 * W), out_f32.shape
    assert jnp.allclose(out_f32, ref, atol=1e-4, rtol=1e-4), \
        float(jnp.max(jnp.abs(out_f32 - ref)))

    # Fast path (bf16 streaming, f32 MXU accumulation): loose sanity check.
    out_bf16 = jax.block_until_ready(linknet_up(x, params))
    assert out_bf16.shape == (N, int(out_channels), 2 * H, 2 * W), out_bf16.shape
    assert jnp.allclose(out_bf16, ref, atol=1e-1, rtol=1e-1), \
        float(jnp.max(jnp.abs(out_bf16 - ref)))

    print("KERNEL_OK")
</pallas_src>

<mosaic_0001>
module attributes {stable_mosaic.version = 11 : i64} {
  func.func @_linknet_up_kernel(%arg0: i32, %arg1: memref<256x8xf32, #tpu.memory_space<vmem>>, %arg2: memref<8x4xf32, #tpu.memory_space<vmem>>, %arg3: memref<1x4xf32, #tpu.memory_space<vmem>>, %arg4: memref<4x8xf32, #tpu.memory_space<vmem>>, %arg5: memref<4x8xf32, #tpu.memory_space<vmem>>, %arg6: memref<1x8xf32, #tpu.memory_space<vmem>>, %arg7: memref<8x16xf32, #tpu.memory_space<vmem>>, %arg8: memref<1x16xf32, #tpu.memory_space<vmem>>, %arg9: memref<16x2x16x16xf32, #tpu.memory_space<vmem>>) attributes {dimension_semantics = [#tpu.dimension_semantics<parallel>], iteration_bounds = array<i64: 2>, scalar_prefetch = 0 : i64, scratch_operands = 0 : i64, tpu.core_type = #tpu.core_type<tc>, window_params = [{transform_indices = @transform_0, window_bounds = array<i64: 256, 8>}, {pipeline_mode = #tpu.pipeline_mode<synchronous>, transform_indices = @transform_1, window_bounds = array<i64: 8, 4>}, {pipeline_mode = #tpu.pipeline_mode<synchronous>, transform_indices = @transform_2, window_bounds = array<i64: 1, 4>}, {pipeline_mode = #tpu.pipeline_mode<synchronous>, transform_indices = @transform_3, window_bounds = array<i64: 4, 8>}, {pipeline_mode = #tpu.pipeline_mode<synchronous>, transform_indices = @transform_4, window_bounds = array<i64: 4, 8>}, {pipeline_mode = #tpu.pipeline_mode<synchronous>, transform_indices = @transform_5, window_bounds = array<i64: 1, 8>}, {pipeline_mode = #tpu.pipeline_mode<synchronous>, transform_indices = @transform_6, window_bounds = array<i64: 8, 16>}, {pipeline_mode = #tpu.pipeline_mode<synchronous>, transform_indices = @transform_7, window_bounds = array<i64: 1, 16>}, {transform_indices = @transform_8, window_bounds = array<i64: 16, 2, 16, 16>}]} {
    %c0 = arith.constant 0 : index
    %c0_0 = arith.constant 0 : index
    %0 = vector.load %arg1[%c0, %c0_0] : memref<256x8xf32, #tpu.memory_space<vmem>>, vector<256x8xf32>
    %c0_1 = arith.constant 0 : index
    %c0_2 = arith.constant 0 : index
    %1 = vector.load %arg2[%c0_1, %c0_2] : memref<8x4xf32, #tpu.memory_space<vmem>>, vector<8x4xf32>
    %cst = arith.constant dense<0.000000e+00> : vector<256x4xf32>
    %2 = tpu.matmul %0, %1, %cst {dimension_numbers = #tpu.dot_dimension_numbers<[1], [0], [0], [1], [0, 0, 1, 1], [], []>} : vector<256x8xf32>, vector<8x4xf32>, vector<256x4xf32> -> vector<256x4xf32>
    %c0_3 = arith.constant 0 : index
    %c0_4 = arith.constant 0 : index
    %3 = vector.load %arg3[%c0_3, %c0_4] : memref<1x4xf32, #tpu.memory_space<vmem>>, vector<1x4xf32>
    %4 = vector.broadcast %3 : vector<1x4xf32> to vector<256x4xf32>
    %5 = arith.addf %2, %4 : vector<256x4xf32>
    %cst_5 = arith.constant 0.000000e+00 : f32
    %6 = vector.broadcast %cst_5 : f32 to vector<256x4xf32>
    %7 = arith.maximumf %5, %6 : vector<256x4xf32>
    %c0_6 = arith.constant 0 : index
    %c0_7 = arith.constant 0 : index
    %8 = vector.load %arg4[%c0_6, %c0_7] : memref<4x8xf32, #tpu.memory_space<vmem>>, vector<4x8xf32>
    %cst_8 = arith.constant dense<0.000000e+00> : vector<256x8xf32>
    %9 = tpu.matmul %7, %8, %cst_8 {dimension_numbers = #tpu.dot_dimension_numbers<[1], [0], [0], [1], [0, 0, 1, 1], [], []>} : vector<256x4xf32>, vector<4x8xf32>, vector<256x8xf32> -> vector<256x8xf32>
    %c0_9 = arith.constant 0 : index
    %c0_10 = arith.constant 0 : index
    %10 = vector.load %arg6[%c0_9, %c0_10] : memref<1x8xf32, #tpu.memory_space<vmem>>, vector<1x8xf32>
    %11 = vector.broadcast %10 : vector<1x8xf32> to vector<256x8xf32>
    %12 = arith.addf %9, %11 : vector<256x8xf32>
    %cst_11 = arith.constant 0.000000e+00 : f32
    %13 = vector.broadcast %cst_11 : f32 to vector<256x8xf32>
    %14 = arith.maximumf %12, %13 : vector<256x8xf32>
    %c0_12 = arith.constant 0 : index
    %c0_13 = arith.constant 0 : index
    %15 = vector.load %arg7[%c0_12, %c0_13] : memref<8x16xf32, #tpu.memory_space<vmem>>, vector<8x16xf32>
    %cst_14 = arith.constant dense<0.000000e+00> : vector<256x16xf32>
    %16 = tpu.matmul %14, %15, %cst_14 {dimension_numbers = #tpu.dot_dimension_numbers<[1], [0], [0], [1], [0, 0, 1, 1], [], []>} : vector<256x8xf32>, vector<8x16xf32>, vector<256x16xf32> -> vector<256x16xf32>
    %c0_15 = arith.constant 0 : index
    %c0_16 = arith.constant 0 : index
    %17 = vector.load %arg8[%c0_15, %c0_16] : memref<1x16xf32, #tpu.memory_space<vmem>>, vector<1x16xf32>
    %18 = vector.broadcast %17 : vector<1x16xf32> to vector<256x16xf32>
    %19 = arith.addf %16, %18 : vector<256x16xf32>
    %cst_17 = arith.constant 0.000000e+00 : f32
    %20 = vector.broadcast %cst_17 : f32 to vector<256x16xf32>
    %21 = arith.maximumf %19, %20 : vector<256x16xf32>
    %22 = vector.shape_cast %21 : vector<256x16xf32> to vector<16x16x16xf32>
    %c0_18 = arith.constant 0 : index
    %c0_19 = arith.constant 0 : index
    %c0_20 = arith.constant 0 : index
    %c0_21 = arith.constant 0 : index
    %23 = vector.load %arg9[%c0_18, %c0_19, %c0_20, %c0_21] : memref<16x2x16x16xf32, #tpu.memory_space<vmem>>, vector<16x1x16x16xf32>
    %24 = vector.shape_cast %23 : vector<16x1x16x16xf32> to vector<16x16x16xf32>
    %25 = vector.shape_cast %22 : vector<16x16x16xf32> to vector<16x1x16x16xf32>
    tpu.vector_store %arg9[%c0_18, %c0_19, %c0_20, %c0_21], %25 {strides = array<i32>} : memref<16x2x16x16xf32, #tpu.memory_space<vmem>>, vector<16x1x16x16xf32>,
    %c0_22 = arith.constant 0 : index
    %c0_23 = arith.constant 0 : index
    %26 = vector.load %arg5[%c0_22, %c0_23] : memref<4x8xf32, #tpu.memory_space<vmem>>, vector<4x8xf32>
    %cst_24 = arith.constant dense<0.000000e+00> : vector<256x8xf32>
    %27 = tpu.matmul %7, %26, %cst_24 {dimension_numbers = #tpu.dot_dimension_numbers<[1], [0], [0], [1], [0, 0, 1, 1], [], []>} : vector<256x4xf32>, vector<4x8xf32>, vector<256x8xf32> -> vector<256x8xf32>
    %c0_25 = arith.constant 0 : index
    %c0_26 = arith.constant 0 : index
    %28 = vector.load %arg6[%c0_25, %c0_26] : memref<1x8xf32, #tpu.memory_space<vmem>>, vector<1x8xf32>
    %29 = vector.broadcast %28 : vector<1x8xf32> to vector<256x8xf32>
    %30 = arith.addf %27, %29 : vector<256x8xf32>
    %cst_27 = arith.constant 0.000000e+00 : f32
    %31 = vector.broadcast %cst_27 : f32 to vector<256x8xf32>
    %32 = arith.maximumf %30, %31 : vector<256x8xf32>
    %c0_28 = arith.constant 0 : index
    %c0_29 = arith.constant 0 : index
    %33 = vector.load %arg7[%c0_28, %c0_29] : memref<8x16xf32, #tpu.memory_space<vmem>>, vector<8x16xf32>
    %cst_30 = arith.constant dense<0.000000e+00> : vector<256x16xf32>
    %34 = tpu.matmul %32, %33, %cst_30 {dimension_numbers = #tpu.dot_dimension_numbers<[1], [0], [0], [1], [0, 0, 1, 1], [], []>} : vector<256x8xf32>, vector<8x16xf32>, vector<256x16xf32> -> vector<256x16xf32>
    %c0_31 = arith.constant 0 : index
    %c0_32 = arith.constant 0 : index
    %35 = vector.load %arg8[%c0_31, %c0_32] : memref<1x16xf32, #tpu.memory_space<vmem>>, vector<1x16xf32>
    %36 = vector.broadcast %35 : vector<1x16xf32> to vector<256x16xf32>
    %37 = arith.addf %34, %36 : vector<256x16xf32>
    %cst_33 = arith.constant 0.000000e+00 : f32
    %38 = vector.broadcast %cst_33 : f32 to vector<256x16xf32>
    %39 = arith.maximumf %37, %38 : vector<256x16xf32>
    %40 = vector.shape_cast %39 : vector<256x16xf32> to vector<16x16x16xf32>
    %c0_34 = arith.constant 0 : index
    %c1 = arith.constant 1 : index
    %c0_35 = arith.constant 0 : index
    %c0_36 = arith.constant 0 : index
    %41 = vector.load %arg9[%c0_34, %c1, %c0_35, %c0_36] : memref<16x2x16x16xf32, #tpu.memory_space<vmem>>, vector<16x1x16x16xf32>
    %42 = vector.shape_cast %41 : vector<16x1x16x16xf32> to vector<16x16x16xf32>
    %43 = vector.shape_cast %40 : vector<16x16x16xf32> to vector<16x1x16x16xf32>
    tpu.vector_store %arg9[%c0_34, %c1, %c0_35, %c0_36], %43 {strides = array<i32>} : memref<16x2x16x16xf32, #tpu.memory_space<vmem>>, vector<16x1x16x16xf32>,
    return
  }
  func.func @transform_0(%arg0: i32) -> (i32, i32) {
    %c0_i32 = arith.constant 0 : i32
    %c0_i32_0 = arith.constant 0 : i32
    return %arg0, %c0_i32 : i32, i32
  }
  func.func @transform_1(%arg0: i32) -> (i32, i32) {
    %c0_i32 = arith.constant 0 : i32
    %c0_i32_0 = arith.constant 0 : i32
    %c0_i32_1 = arith.constant 0 : i32
    return %c0_i32, %c0_i32_0 : i32, i32
  }
  func.func @transform_2(%arg0: i32) -> (i32, i32) {
    %c0_i32 = arith.constant 0 : i32
    %c0_i32_0 = arith.constant 0 : i32
    %c0_i32_1 = arith.constant 0 : i32
    return %c0_i32, %c0_i32_0 : i32, i32
  }
  func.func @transform_3(%arg0: i32) -> (i32, i32) {
    %c0_i32 = arith.constant 0 : i32
    %c0_i32_0 = arith.constant 0 : i32
    %c0_i32_1 = arith.constant 0 : i32
    return %c0_i32, %c0_i32_0 : i32, i32
  }
  func.func @transform_4(%arg0: i32) -> (i32, i32) {
    %c0_i32 = arith.constant 0 : i32
    %c0_i32_0 = arith.constant 0 : i32
    %c0_i32_1 = arith.constant 0 : i32
    return %c0_i32, %c0_i32_0 : i32, i32
  }
  func.func @transform_5(%arg0: i32) -> (i32, i32) {
    %c0_i32 = arith.constant 0 : i32
    %c0_i32_0 = arith.constant 0 : i32
    %c0_i32_1 = arith.constant 0 : i32
    return %c0_i32, %c0_i32_0 : i32, i32
  }
  func.func @transform_6(%arg0: i32) -> (i32, i32) {
    %c0_i32 = arith.constant 0 : i32
    %c0_i32_0 = arith.constant 0 : i32
    %c0_i32_1 = arith.constant 0 : i32
    return %c0_i32, %c0_i32_0 : i32, i32
  }
  func.func @transform_7(%arg0: i32) -> (i32, i32) {
    %c0_i32 = arith.constant 0 : i32
    %c0_i32_0 = arith.constant 0 : i32
    %c0_i32_1 = arith.constant 0 : i32
    return %c0_i32, %c0_i32_0 : i32, i32
  }
  func.func @transform_8(%arg0: i32) -> (i32, i32, i32, i32) {
    %c0_i32 = arith.constant 0 : i32
    %c0_i32_0 = arith.constant 0 : i32
    %c0_i32_1 = arith.constant 0 : i32
    %c0_i32_2 = arith.constant 0 : i32
    return %arg0, %c0_i32, %c0_i32_0, %c0_i32_1 : i32, i32, i32, i32
  }
}

</mosaic_0001>

<llo_original>
// kernel: tpu_custom_call.1
$region0: #{tpu_custom_call.1}
  #allocation0 [shape = 'u32[]', space=smem, size = 0x4, offset = 0x4, fixed_abs, tag = 'smem constant byte address 0x4 - core index']
  #allocation1 [shape = 'u32[144,128]{1,0:T(1,128)}', space=vmem, size = 0x12000, scoped, tag = 'internal scratch']
  %s0 = inlined_call_operand.vmem [shape: f32[512,8], index: 0, kind: input, shape index: {}]
  %s1 = inlined_call_operand.vmem [shape: f32[8,4], index: 1, kind: input, shape index: {}]
  %s2 = inlined_call_operand.vmem [shape: f32[1,4], index: 2, kind: input, shape index: {}]
  %s3 = inlined_call_operand.vmem [shape: f32[4,8], index: 3, kind: input, shape index: {}]
  %s4 = inlined_call_operand.vmem [shape: f32[4,8], index: 4, kind: input, shape index: {}]
  %s5 = inlined_call_operand.vmem [shape: f32[1,8], index: 5, kind: input, shape index: {}]
  %s6 = inlined_call_operand.vmem [shape: f32[8,16], index: 6, kind: input, shape index: {}]
  %s7 = inlined_call_operand.vmem [shape: f32[1,16], index: 7, kind: input, shape index: {}]
  %s8 = inlined_call_operand.vmem [shape: f32[32,2,16,16], index: 8, kind: output, shape index: {}]
  %s9 = sld [smem:[#allocation0]]
  $region65: #{tpu_custom_call.1} parent=0
    _
  %s11 = ssub.s32 1, %s9
  %s12 = scalar_select 0, %s11, %s9
  loop: start=0, step=1, limit=4
  $region2: #{tpu_custom_call.1} parent=0 // loop_pre_header
    _
  $region3: #{tpu_custom_call.1} parent=0 // loop_header
    %s14 = sphi 0, %s18
    %p15 = scmp.ge.s32.totalorder %s14, 4
    %s24 = sphi 0, %s26
    %s27 = sphi 0, %s24
    %s28 = sphi 0, %s27
    %s44 = sphi 0, %s28
    %s48 = sphi 0, %s48
    %s50 = sphi 0, %s48
    %s51 = sphi 0, %s50
    %s65 = sphi 0, %s51
    %s69 = sphi 0, %s69
    %s71 = sphi 0, %s69
    %s72 = sphi 0, %s71
    %s86 = sphi 0, %s72
    %s90 = sphi 0, %s90
    %s92 = sphi 0, %s90
    %s93 = sphi 0, %s92
    %s107 = sphi 0, %s93
    %s111 = sphi 0, %s111
    %s113 = sphi 0, %s111
    %s114 = sphi 0, %s113
    %s128 = sphi 0, %s114
    %s132 = sphi 0, %s132
    %s134 = sphi 0, %s132
    %s135 = sphi 0, %s134
    %s149 = sphi 0, %s135
    %s153 = sphi 0, %s153
    %s155 = sphi 0, %s153
    %s156 = sphi 0, %s155
    %s170 = sphi 0, %s156
    %s174 = sphi 0, %s174
    %s176 = sphi 0, %s174
    %s177 = sphi 0, %s176
    %s191 = sphi 0, %s177
    %s197 = sphi 0, %s199
    %s200 = sphi 0, %s197
    %s201 = sphi 0, %s200
    %s217 = sphi 0, %s201
  $region4: #{tpu_custom_call.1} parent=0 // loop_header_branch
    %17 = sbr.rel (%p15) target = $region8
  $region5: #{tpu_custom_call.1} parent=0 // loop_body
    %s19 = ssub.s32 %s14, 1
    %s20 = ssub.s32 %s14, 2
    %s21 = sadd.s32 %s14, 1
    %s22 = ssub.s32 %s14, %s21
    %p23 = scmp.eq.s32.totalorder %s22, 0
    %s25 = sadd.s32 %s24, 1
    %s26 = scalar_select %p23, %s24, %s25
    %p29 = pneg %p23
    %p30 = scmp.eq.s32.totalorder %s14, 1
    %p31 = por %p29, %p30
    %p32 = scmp.ne.s32.totalorder %s24, %s27
    %p33 = scmp.eq.s32.totalorder %s14, 0
    %p34 = por %p32, %p33
    %p35 = scmp.ne.s32.totalorder %s24, %s27
    %p36 = scmp.eq.s32.totalorder %s19, 1
    %p37 = por %p35, %p36
    %p38 = scmp.ne.s32.totalorder %s27, %s28
    %p39 = scmp.eq.s32.totalorder %s19, 0
    %p40 = por %p38, %p39
    %p41 = scmp.ne.s32.totalorder %s27, %s28
    %p42 = scmp.eq.s32.totalorder %s20, 1
    %p43 = por %p41, %p42
    %p45 = scmp.ne.s32.totalorder %s28, %s44
    %p46 = scmp.eq.s32.totalorder %s20, 0
    %p47 = por %p45, %p46
    %s49 = sadd.s32 %s48, 1
    %p52 = scmp.eq.s32.totalorder %s14, 1
    %p53 = scmp.ne.s32.totalorder %s48, %s50
    %p54 = scmp.eq.s32.totalorder %s14, 0
    %p55 = por %p53, %p54
    %p56 = scmp.ne.s32.totalorder %s48, %s50
    %p57 = scmp.eq.s32.totalorder %s19, 1
    %p58 = por %p56, %p57
    %p59 = scmp.ne.s32.totalorder %s50, %s51
    %p60 = scmp.eq.s32.totalorder %s19, 0
    %p61 = por %p59, %p60
    %p62 = scmp.ne.s32.totalorder %s50, %s51
    %p63 = scmp.eq.s32.totalorder %s20, 1
    %p64 = por %p62, %p63
    %p66 = scmp.ne.s32.totalorder %s51, %s65
    %p67 = scmp.eq.s32.totalorder %s20, 0
    %p68 = por %p66, %p67
    %s70 = sadd.s32 %s69, 1
    %p73 = scmp.eq.s32.totalorder %s14, 1
    %p74 = scmp.ne.s32.totalorder %s69, %s71
    %p75 = scmp.eq.s32.totalorder %s14, 0
    %p76 = por %p74, %p75
    %p77 = scmp.ne.s32.totalorder %s69, %s71
    %p78 = scmp.eq.s32.totalorder %s19, 1
    %p79 = por %p77, %p78
    %p80 = scmp.ne.s32.totalorder %s71, %s72
    %p81 = scmp.eq.s32.totalorder %s19, 0
    %p82 = por %p80, %p81
    %p83 = scmp.ne.s32.totalorder %s71, %s72
    %p84 = scmp.eq.s32.totalorder %s20, 1
    %p85 = por %p83, %p84
    %p87 = scmp.ne.s32.totalorder %s72, %s86
    %p88 = scmp.eq.s32.totalorder %s20, 0
    %p89 = por %p87, %p88
    %s91 = sadd.s32 %s90, 1
    %p94 = scmp.eq.s32.totalorder %s14, 1
    %p95 = scmp.ne.s32.totalorder %s90, %s92
    %p96 = scmp.eq.s32.totalorder %s14, 0
    %p97 = por %p95, %p96
    %p98 = scmp.ne.s32.totalorder %s90, %s92
    %p99 = scmp.eq.s32.totalorder %s19, 1
    %p100 = por %p98, %p99
    %p101 = scmp.ne.s32.totalorder %s92, %s93
    %p102 = scmp.eq.s32.totalorder %s19, 0
    %p103 = por %p101, %p102
    %p104 = scmp.ne.s32.totalorder %s92, %s93
    %p105 = scmp.eq.s32.totalorder %s20, 1
    %p106 = por %p104, %p105
    %p108 = scmp.ne.s32.totalorder %s93, %s107
    %p109 = scmp.eq.s32.totalorder %s20, 0
    %p110 = por %p108, %p109
    %s112 = sadd.s32 %s111, 1
    %p115 = scmp.eq.s32.totalorder %s14, 1
    %p116 = scmp.ne.s32.totalorder %s111, %s113
    %p117 = scmp.eq.s32.totalorder %s14, 0
    %p118 = por %p116, %p117
    %p119 = scmp.ne.s32.totalorder %s111, %s113
    %p120 = scmp.eq.s32.totalorder %s19, 1
    %p121 = por %p119, %p120
    %p122 = scmp.ne.s32.totalorder %s113, %s114
    %p123 = scmp.eq.s32.totalorder %s19, 0
    %p124 = por %p122, %p123
    %p125 = scmp.ne.s32.totalorder %s113, %s114
    %p126 = scmp.eq.s32.totalorder %s20, 1
    %p127 = por %p125, %p126
    %p129 = scmp.ne.s32.totalorder %s114, %s128
    %p130 = scmp.eq.s32.totalorder %s20, 0
    %p131 = por %p129, %p130
    %s133 = sadd.s32 %s132, 1
    %p136 = scmp.eq.s32.totalorder %s14, 1
    %p137 = scmp.ne.s32.totalorder %s132, %s134
    %p138 = scmp.eq.s32.totalorder %s14, 0
    %p139 = por %p137, %p138
    %p140 = scmp.ne.s32.totalorder %s132, %s134
    %p141 = scmp.eq.s32.totalorder %s19, 1
    %p142 = por %p140, %p141
    %p143 = scmp.ne.s32.totalorder %s134, %s135
    %p144 = scmp.eq.s32.totalorder %s19, 0
    %p145 = por %p143, %p144
    %p146 = scmp.ne.s32.totalorder %s134, %s135
    %p147 = scmp.eq.s32.totalorder %s20, 1
    %p148 = por %p146, %p147
    %p150 = scmp.ne.s32.totalorder %s135, %s149
    %p151 = scmp.eq.s32.totalorder %s20, 0
    %p152 = por %p150, %p151
    %s154 = sadd.s32 %s153, 1
    %p157 = scmp.eq.s32.totalorder %s14, 1
    %p158 = scmp.ne.s32.totalorder %s153, %s155
    %p159 = scmp.eq.s32.totalorder %s14, 0
    %p160 = por %p158, %p159
    %p161 = scmp.ne.s32.totalorder %s153, %s155
    %p162 = scmp.eq.s32.totalorder %s19, 1
    %p163 = por %p161, %p162
    %p164 = scmp.ne.s32.totalorder %s155, %s156
    %p165 = scmp.eq.s32.totalorder %s19, 0
    %p166 = por %p164, %p165
    %p167 = scmp.ne.s32.totalorder %s155, %s156
    %p168 = scmp.eq.s32.totalorder %s20, 1
    %p169 = por %p167, %p168
    %p171 = scmp.ne.s32.totalorder %s156, %s170
    %p172 = scmp.eq.s32.totalorder %s20, 0
    %p173 = por %p171, %p172
    %s175 = sadd.s32 %s174, 1
    %p178 = scmp.eq.s32.totalorder %s14, 1
    %p179 = scmp.ne.s32.totalorder %s174, %s176
    %p180 = scmp.eq.s32.totalorder %s14, 0
    %p181 = por %p179, %p180
    %p182 = scmp.ne.s32.totalorder %s174, %s176
    %p183 = scmp.eq.s32.totalorder %s19, 1
    %p184 = por %p182, %p183
    %p185 = scmp.ne.s32.totalorder %s176, %s177
    %p186 = scmp.eq.s32.totalorder %s19, 0
    %p187 = por %p185, %p186
    %p188 = scmp.ne.s32.totalorder %s176, %s177
    %p189 = scmp.eq.s32.totalorder %s20, 1
    %p190 = por %p188, %p189
    %p192 = scmp.ne.s32.totalorder %s177, %s191
    %p193 = scmp.eq.s32.totalorder %s20, 0
    %p194 = por %p192, %p193
    %s195 = ssub.s32 %s14, %s21
    %p196 = scmp.eq.s32.totalorder %s195, 0
    %s198 = sadd.s32 %s197, 1
    %s199 = scalar_select %p196, %s197, %s198
    %p202 = pneg %p196
    %p203 = scmp.eq.s32.totalorder %s14, 1
    %p204 = por %p202, %p203
    %p205 = scmp.ne.s32.totalorder %s197, %s200
    %p206 = scmp.eq.s32.totalorder %s14, 0
    %p207 = por %p205, %p206
    %p208 = scmp.ne.s32.totalorder %s197, %s200
    %p209 = scmp.eq.s32.totalorder %s19, 1
    %p210 = por %p208, %p209
    %p211 = scmp.ne.s32.totalorder %s200, %s201
    %p212 = scmp.eq.s32.totalorder %s19, 0
    %p213 = por %p211, %p212
    %p214 = scmp.ne.s32.totalorder %s200, %s201
    %p215 = scmp.eq.s32.totalorder %s20, 1
    %p216 = por %p214, %p215
    %p218 = scmp.ne.s32.totalorder %s201, %s217
    %p219 = scmp.eq.s32.totalorder %s20, 0
    %p220 = por %p218, %p219
    %p221 = scmp.le.s32.totalorder 1, %s14
    %p222 = scmp.lt.s32.totalorder %s14, 3
    %p223 = pnand %p221, %p222
    %p224 = pneg %p223
    // Predicated region
    $region9: #{tpu_custom_call.1} parent=5 // pred_check
      _
    $region10: #{tpu_custom_call.1} parent=5 // pred_check_branch
      %226 = sbr.rel (%p223) target = $region12
    $region11: #{tpu_custom_call.1} parent=5 // pred_region
      %s227 = ssub.s32 %s14, 1
      // Predicated region
      $region13: #{tpu_custom_call.1} parent=11 // pred_check
        %p228 = pneg %p61
      $region14: #{tpu_custom_call.1} parent=11 // pred_check_branch
        %230 = sbr.rel (%p228) target = $region16
      $region15: #{tpu_custom_call.1} parent=11 // pred_region
        _
      $region16: #{tpu_custom_call.1} parent=11 // pred_fallthru
        _
      // Predicated region
      $region17: #{tpu_custom_call.1} parent=11 // pred_check
        %p231 = pneg %p82
      $region18: #{tpu_custom_call.1} parent=11 // pred_check_branch
        %233 = sbr.rel (%p231) target = $region20
      $region19: #{tpu_custom_call.1} parent=11 // pred_region
        _
      $region20: #{tpu_custom_call.1} parent=11 // pred_fallthru
        _
      // Predicated region
      $region21: #{tpu_custom_call.1} parent=11 // pred_check
        %p234 = pneg %p103
      $region22: #{tpu_custom_call.1} parent=11 // pred_check_branch
        %236 = sbr.rel (%p234) target = $region24
      $region23: #{tpu_custom_call.1} parent=11 // pred_region
        _
      $region24: #{tpu_custom_call.1} parent=11 // pred_fallthru
        _
      // Predicated region
      $region25: #{tpu_custom_call.1} parent=11 // pred_check
        %p237 = pneg %p124
      $region26: #{tpu_custom_call.1} parent=11 // pred_check_branch
        %239 = sbr.rel (%p237) target = $region28
      $region27: #{tpu_custom_call.1} parent=11 // pred_region
        _
      $region28: #{tpu_custom_call.1} parent=11 // pred_fallthru
        _
      // Predicated region
      $region29: #{tpu_custom_call.1} parent=11 // pred_check
        %p240 = pneg %p145
      $region30: #{tpu_custom_call.1} parent=11 // pred_check_branch
        %242 = sbr.rel (%p240) target = $region32
      $region31: #{tpu_custom_call.1} parent=11 // pred_region
        _
      $region32: #{tpu_custom_call.1} parent=11 // pred_fallthru
        _
      // Predicated region
      $region33: #{tpu_custom_call.1} parent=11 // pred_check
        %p243 = pneg %p166
      $region34: #{tpu_custom_call.1} parent=11 // pred_check_branch
        %245 = sbr.rel (%p243) target = $region36
      $region35: #{tpu_custom_call.1} parent=11 // pred_region
        _
      $region36: #{tpu_custom_call.1} parent=11 // pred_fallthru
        _
      // Predicated region
      $region37: #{tpu_custom_call.1} parent=11 // pred_check
        %p246 = pneg %p187
      $region38: #{tpu_custom_call.1} parent=11 // pred_check_branch
        %248 = sbr.rel (%p246) target = $region40
      $region39: #{tpu_custom_call.1} parent=11 // pred_region
        _
      $region40: #{tpu_custom_call.1} parent=11 // pred_fallthru
        _
    $region12: #{tpu_custom_call.1} parent=5 // pred_fallthru
      _
    %p249 = scmp.lt.s32.totalorder %s14, 2
    // Predicated region
    $region41: #{tpu_custom_call.1} parent=5 // pred_check
      %p250 = pneg %p249
    $region42: #{tpu_custom_call.1} parent=5 // pred_check_branch
      %252 = sbr.rel (%p250) target = $region44
    $region43: #{tpu_custom_call.1} parent=5 // pred_region
      // Predicated region
      $region45: #{tpu_custom_call.1} parent=43 // pred_check
        %p253 = pneg %p34
      $region46: #{tpu_custom_call.1} parent=43 // pred_check_branch
        %255 = sbr.rel (%p253) target = $region48
      $region47: #{tpu_custom_call.1} parent=43 // pred_region
        %s256 = smul.u32 32, %s14
        %p257 = scmp.lt.s32.totalorder %s256, 63
        %s258 = scalar_select %p257, %s256, 63
        %s259 = smul.addr %s258, 8
        %s260 = scalar_lea.vmem %s0, %s259
        %s261 = smul.u32 32, %s14
      $region48: #{tpu_custom_call.1} parent=43 // pred_fallthru
        _
    $region44: #{tpu_custom_call.1} parent=5 // pred_fallthru
      _
    %p262 = scmp.le.s32.totalorder 1, %s14
    %p263 = scmp.lt.s32.totalorder %s14, 3
    %p264 = pnand %p262, %p263
    %p265 = pneg %p264
    // Predicated region
    $region49: #{tpu_custom_call.1} parent=5 // pred_check
      _
    $region50: #{tpu_custom_call.1} parent=5 // pred_check_branch
      %267 = sbr.rel (%p264) target = $region52
    $region51: #{tpu_custom_call.1} parent=5 // pred_region
      %s268 = ssub.s32 %s14, 1
      %s269 = smul.u32 32, %s19
      %p270 = scmp.lt.s32.totalorder %s269, 63
      %s271 = scalar_select %p270, %s269, 63
      %s272 = smul.addr %s271, 8
      %s273 = scalar_lea.vmem %s0, %s272
      %p274 = pneg %p40
      %p275 = pneg %p37
      %p276 = pneg %p61
      %p277 = pneg %p58
      %p278 = pneg %p82
      %p279 = pneg %p79
      %p280 = pneg %p103
      %p281 = pneg %p100
      %p282 = pneg %p124
      %p283 = pneg %p121
      %p284 = pneg %p145
      %p285 = pneg %p142
      %p286 = pneg %p166
      %p287 = pneg %p163
      %p288 = pneg %p187
      %p289 = pneg %p184
      %p290 = pneg %p213
      %p291 = pneg %p210
      %s292 = smul.u32 16, %s19
      %p293 = scmp.lt.s32.totalorder %s292, 31
      %s294 = scalar_select %p293, %s292, 31
      %s295 = smul.addr %s294, 4
      %s296 = smul.addr %s295, 8
      %s297 = scalar_lea.vmem %s8, %s296
      %s298 = smul.u32 32, %s19
      %p299 = scmp.lt.s32.totalorder %s298, 63
      %s300 = scalar_select %p299, %s298, 63
      %s301 = smul.addr %s300, 8
      %s302 = scalar_lea.vmem %s0, %s301
      %s303 = smul.u32 32, %s19
      %s304 = smul.u32 16, %s19
      %p305 = scmp.lt.s32.totalorder %s304, 31
      %s306 = scalar_select %p305, %s304, 31
      %s307 = smul.addr %s306, 4
      %s308 = smul.addr %s307, 8
      %s309 = scalar_lea.vmem %s8, %s308
      %s310 = smul.u32 16, %s19
      %v311 = vld [vmem:[%s302] sm:$0xff]
      %v312 = vld [vmem:[%s302 + $0x8] sm:$0xff]
      %v313 = vld [vmem:[%s302 + $0x10] sm:$0xff]
      %v314 = vld [vmem:[%s302 + $0x18] sm:$0xff]
      %v315 = vld [vmem:[%s302 + $0x20] sm:$0xff]
      %v316 = vld [vmem:[%s302 + $0x28] sm:$0xff]
      %v317 = vld [vmem:[%s302 + $0x30] sm:$0xff]
      %v318 = vld [vmem:[%s302 + $0x38] sm:$0xff]
      %v319 = vld [vmem:[%s302 + $0x40] sm:$0xff]
      %v320 = vld [vmem:[%s302 + $0x48] sm:$0xff]
      %v321 = vld [vmem:[%s302 + $0x50] sm:$0xff]
      %v322 = vld [vmem:[%s302 + $0x58] sm:$0xff]
      %v323 = vld [vmem:[%s302 + $0x60] sm:$0xff]
      %v324 = vld [vmem:[%s302 + $0x68] sm:$0xff]
      %v325 = vld [vmem:[%s302 + $0x70] sm:$0xff]
      %v326 = vld [vmem:[%s302 + $0x78] sm:$0xff]
      %v327 = vld [vmem:[%s302 + $0x80] sm:$0xff]
      %v328 = vld [vmem:[%s302 + $0x88] sm:$0xff]
      %v329 = vld [vmem:[%s302 + $0x90] sm:$0xff]
      %v330 = vld [vmem:[%s302 + $0x98] sm:$0xff]
      %v331 = vld [vmem:[%s302 + $0xa0] sm:$0xff]
      %v332 = vld [vmem:[%s302 + $0xa8] sm:$0xff]
      %v333 = vld [vmem:[%s302 + $0xb0] sm:$0xff]
      %v334 = vld [vmem:[%s302 + $0xb8] sm:$0xff]
      %v335 = vld [vmem:[%s302 + $0xc0] sm:$0xff]
      %v336 = vld [vmem:[%s302 + $0xc8] sm:$0xff]
      %v337 = vld [vmem:[%s302 + $0xd0] sm:$0xff]
      %v338 = vld [vmem:[%s302 + $0xd8] sm:$0xff]
      %v339 = vld [vmem:[%s302 + $0xe0] sm:$0xff]
      %v340 = vld [vmem:[%s302 + $0xe8] sm:$0xff]
      %v341 = vld [vmem:[%s302 + $0xf0] sm:$0xff]
      %v342 = vld [vmem:[%s302 + $0xf8] sm:$0xff]
      %v343 = vld [vmem:[%s1] sm:$0xff]
      %v344 = vld [vmem:[%s2] sm:$0x1]
      %v346 = vlaneseq
      %v347 = vshrl.u32 %v346, 7
      %v348 = vsub.s32 0, %v347
      %v349 = vrot.slane %v344, %v348
      %vm351 = vcmask 64512
      %v353 = vsel %vm351, %v311, 0
      %v356 = vsel %vm351, %v312, 0
      %v359 = vsel %vm351, %v313, 0
      %v362 = vsel %vm351, %v314, 0
      %v365 = vsel %vm351, %v315, 0
      %v368 = vsel %vm351, %v316, 0
      %v371 = vsel %vm351, %v317, 0
      %v374 = vsel %vm351, %v318, 0
      %v377 = vsel %vm351, %v319, 0
      %v380 = vsel %vm351, %v320, 0
      %v383 = vsel %vm351, %v321, 0
      %v386 = vsel %vm351, %v322, 0
      %v389 = vsel %vm351, %v323, 0
      %v392 = vsel %vm351, %v324, 0
      %v395 = vsel %vm351, %v325, 0
      %v398 = vsel %vm351, %v326, 0
      %v401 = vsel %vm351, %v327, 0
      %v404 = vsel %vm351, %v328, 0
      %v407 = vsel %vm351, %v329, 0
      %v410 = vsel %vm351, %v330, 0
      %v413 = vsel %vm351, %v331, 0
      %v416 = vsel %vm351, %v332, 0
      %v419 = vsel %vm351, %v333, 0
      %v422 = vsel %vm351, %v334, 0
      %v425 = vsel %vm351, %v335, 0
      %v428 = vsel %vm351, %v336, 0
      %v431 = vsel %vm351, %v337, 0
      %v434 = vsel %vm351, %v338, 0
      %v437 = vsel %vm351, %v339, 0
      %v440 = vsel %vm351, %v340, 0
      %v443 = vsel %vm351, %v341, 0
      %v446 = vsel %vm351, %v342, 0
      %448 = vmatprep.subr.mxu0 0.0
      %449 = vmatpush1.msra.mxu0 0.0
      %450 = vmatprep.subr.mxu0 0.0
      %451 = vmatpush1.msra.mxu0 0.0
      %452 = vmatprep.subr.mxu0 0.0
      %453 = vmatpush1.msra.mxu0 0.0
      %454 = vmatprep.subr.mxu0 0.0
      %455 = vmatpush1.msra.mxu0 0.0
      %456 = vmatprep.subr.mxu0 0.0
      %457 = vmatpush1.msra.mxu0 0.0
      %458 = vmatprep.subr.mxu0 0.0
      %459 = vmatpush1.msra.mxu0 0.0
      %460 = vmatprep.subr.mxu0 0.0
      %461 = vmatpush1.msra.mxu0 0.0
      %462 = vmatprep.subr.mxu0 0.0
      %463 = vmatpush1.msra.mxu0 0.0
      %464 = vmatprep.subr.mxu0 0.0
      %465 = vmatpush1.msra.mxu0 0.0
      %466 = vmatprep.subr.mxu0 0.0
      %467 = vmatpush1.msra.mxu0 0.0
      %468 = vmatprep.subr.mxu0 0.0
      %469 = vmatpush1.msra.mxu0 0.0
      %470 = vmatprep.subr.mxu0 0.0
      %471 = vmatpush1.msra.mxu0 0.0
      %472 = vmatprep.subr.mxu0 0.0
      %473 = vmatpush1.msra.mxu0 0.0
      %474 = vmatprep.subr.mxu0 0.0
      %475 = vmatpush1.msra.mxu0 0.0
      %476 = vmatprep.subr.mxu0 0.0
      %477 = vmatpush1.msra.mxu0 0.0
      %478 = vmatprep.subr.mxu0 0.0
      %479 = vmatpush1.msra.mxu0 %v343
      %480 = vmatprep.subr.mxu0 0.0
      %481 = vmatpush2.msra.mxu0 0.0
      %482 = vmatprep.subr.mxu0 0.0
      %483 = vmatpush2.msra.mxu0 0.0
      %484 = vmatprep.subr.mxu0 0.0
      %485 = vmatpush2.msra.mxu0 0.0
      %486 = vmatprep.subr.mxu0 0.0
      %487 = vmatpush2.msra.mxu0 0.0
      %488 = vmatprep.subr.mxu0 0.0
      %489 = vmatpush2.msra.mxu0 0.0
      %490 = vmatprep.subr.mxu0 0.0
      %491 = vmatpush2.msra.mxu0 0.0
      %492 = vmatprep.subr.mxu0 0.0
      %493 = vmatpush2.msra.mxu0 0.0
      %494 = vmatprep.subr.mxu0 0.0
      %495 = vmatpush2.msra.mxu0 0.0
      %496 = vmatprep.subr.mxu0 0.0
      %497 = vmatpush2.msra.mxu0 0.0
      %498 = vmatprep.subr.mxu0 0.0
      %499 = vmatpush2.msra.mxu0 0.0
      %500 = vmatprep.subr.mxu0 0.0
      %501 = vmatpush2.msra.mxu0 0.0
      %502 = vmatprep.subr.mxu0 0.0
      %503 = vmatpush2.msra.mxu0 0.0
      %504 = vmatprep.subr.mxu0 0.0
      %505 = vmatpush2.msra.mxu0 0.0
      %506 = vmatprep.subr.mxu0 0.0
      %507 = vmatpush2.msra.mxu0 0.0
      %508 = vmatprep.subr.mxu0 0.0
      %509 = vmatpush2.msra.mxu0 0.0
      %510 = vmatprep.subr.mxu0 0.0
      %511 = vmatpush2.msra.mxu0 0.0
      %512 = vmatprep.mubr.f32.mxu0 0.0
      %513 = vmatmul.mubr.f32.gmra.mxu0 %v353
      %v514 = vpop.f32.mrf.mxu0
      %v515 = vadd.f32 %v349, %v514
      %v516 = vpop.f32.mrf.mxu0
      %517 = vmatprep.mubr.f32.mxu0 0.0
      %518 = vmatmul.mubr.f32.gmra.mxu0 %v356
      %v519 = vpop.f32.mrf.mxu0
      %v520 = vadd.f32 %v349, %v519
      %v521 = vpop.f32.mrf.mxu0
      %522 = vmatprep.mubr.f32.mxu0 0.0
      %523 = vmatmul.mubr.f32.gmra.mxu0 %v359
      %v524 = vpop.f32.mrf.mxu0
      %v525 = vadd.f32 %v349, %v524
      %v526 = vpop.f32.mrf.mxu0
      %527 = vmatprep.mubr.f32.mxu0 0.0
      %528 = vmatmul.mubr.f32.gmra.mxu0 %v362
      %v529 = vpop.f32.mrf.mxu0
      %v530 = vadd.f32 %v349, %v529
      %v531 = vpop.f32.mrf.mxu0
      %532 = vmatprep.mubr.f32.mxu0 0.0
      %533 = vmatmul.mubr.f32.gmra.mxu0 %v365
      %v534 = vpop.f32.mrf.mxu0
      %v535 = vadd.f32 %v349, %v534
      %v536 = vpop.f32.mrf.mxu0
      %537 = vmatprep.mubr.f32.mxu0 0.0
      %538 = vmatmul.mubr.f32.gmra.mxu0 %v368
      %v539 = vpop.f32.mrf.mxu0
      %v540 = vadd.f32 %v349, %v539
      %v541 = vpop.f32.mrf.mxu0
      %542 = vmatprep.mubr.f32.mxu0 0.0
      %543 = vmatmul.mubr.f32.gmra.mxu0 %v371
      %v544 = vpop.f32.mrf.mxu0
      %v545 = vadd.f32 %v349, %v544
      %v546 = vpop.f32.mrf.mxu0
      %547 = vmatprep.mubr.f32.mxu0 0.0
      %548 = vmatmul.mubr.f32.gmra.mxu0 %v374
      %v549 = vpop.f32.mrf.mxu0
      %v550 = vadd.f32 %v349, %v549
      %v551 = vpop.f32.mrf.mxu0
      %552 = vmatprep.mubr.f32.mxu0 0.0
      %553 = vmatmul.mubr.f32.gmra.mxu0 %v377
      %v554 = vpop.f32.mrf.mxu0
      %v555 = vadd.f32 %v349, %v554
      %v556 = vpop.f32.mrf.mxu0
      %557 = vmatprep.mubr.f32.mxu0 0.0
      %558 = vmatmul.mubr.f32.gmra.mxu0 %v380
      %v559 = vpop.f32.mrf.mxu0
      %v560 = vadd.f32 %v349, %v559
      %v561 = vpop.f32.mrf.mxu0
      %562 = vmatprep.mubr.f32.mxu0 0.0
      %563 = vmatmul.mubr.f32.gmra.mxu0 %v383
      %v564 = vpop.f32.mrf.mxu0
      %v565 = vadd.f32 %v349, %v564
      %v566 = vpop.f32.mrf.mxu0
      %567 = vmatprep.mubr.f32.mxu0 0.0
      %568 = vmatmul.mubr.f32.gmra.mxu0 %v386
      %v569 = vpop.f32.mrf.mxu0
      %v570 = vadd.f32 %v349, %v569
      %v571 = vpop.f32.mrf.mxu0
      %572 = vmatprep.mubr.f32.mxu0 0.0
      %573 = vmatmul.mubr.f32.gmra.mxu0 %v389
      %v574 = vpop.f32.mrf.mxu0
      %v575 = vadd.f32 %v349, %v574
      %v576 = vpop.f32.mrf.mxu0
      %577 = vmatprep.mubr.f32.mxu0 0.0
      %578 = vmatmul.mubr.f32.gmra.mxu0 %v392
      %v579 = vpop.f32.mrf.mxu0
      %v580 = vadd.f32 %v349, %v579
      %v581 = vpop.f32.mrf.mxu0
      %582 = vmatprep.mubr.f32.mxu0 0.0
      %583 = vmatmul.mubr.f32.gmra.mxu0 %v395
      %v584 = vpop.f32.mrf.mxu0
      %v585 = vadd.f32 %v349, %v584
      %v586 = vpop.f32.mrf.mxu0
      %587 = vmatprep.mubr.f32.mxu0 0.0
      %588 = vmatmul.mubr.f32.gmra.mxu0 %v398
      %v589 = vpop.f32.mrf.mxu0
      %v590 = vadd.f32 %v349, %v589
      %v591 = vpop.f32.mrf.mxu0
      %592 = vmatprep.mubr.f32.mxu0 0.0
      %593 = vmatmul.mubr.f32.gmra.mxu0 %v401
      %v594 = vpop.f32.mrf.mxu0
      %v595 = vadd.f32 %v349, %v594
      %v596 = vpop.f32.mrf.mxu0
      %597 = vmatprep.mubr.f32.mxu0 0.0
      %598 = vmatmul.mubr.f32.gmra.mxu0 %v404
      %v599 = vpop.f32.mrf.mxu0
      %v600 = vadd.f32 %v349, %v599
      %v601 = vpop.f32.mrf.mxu0
      %602 = vmatprep.mubr.f32.mxu0 0.0
      %603 = vmatmul.mubr.f32.gmra.mxu0 %v407
      %v604 = vpop.f32.mrf.mxu0
      %v605 = vadd.f32 %v349, %v604
      %v606 = vpop.f32.mrf.mxu0
      %607 = vmatprep.mubr.f32.mxu0 0.0
      %608 = vmatmul.mubr.f32.gmra.mxu0 %v410
      %v609 = vpop.f32.mrf.mxu0
      %v610 = vadd.f32 %v349, %v609
      %v611 = vpop.f32.mrf.mxu0
      %612 = vmatprep.mubr.f32.mxu0 0.0
      %613 = vmatmul.mubr.f32.gmra.mxu0 %v413
      %v614 = vpop.f32.mrf.mxu0
      %v615 = vadd.f32 %v349, %v614
      %v616 = vpop.f32.mrf.mxu0
      %617 = vmatprep.mubr.f32.mxu0 0.0
      %618 = vmatmul.mubr.f32.gmra.mxu0 %v416
      %v619 = vpop.f32.mrf.mxu0
      %v620 = vadd.f32 %v349, %v619
      %v621 = vpop.f32.mrf.mxu0
      %622 = vmatprep.mubr.f32.mxu0 0.0
      %623 = vmatmul.mubr.f32.gmra.mxu0 %v419
      %v624 = vpop.f32.mrf.mxu0
      %v625 = vadd.f32 %v349, %v624
      %v626 = vpop.f32.mrf.mxu0
      %627 = vmatprep.mubr.f32.mxu0 0.0
      %628 = vmatmul.mubr.f32.gmra.mxu0 %v422
      %v629 = vpop.f32.mrf.mxu0
      %v630 = vadd.f32 %v349, %v629
      %v631 = vpop.f32.mrf.mxu0
      %632 = vmatprep.mubr.f32.mxu0 0.0
      %633 = vmatmul.mubr.f32.gmra.mxu0 %v425
      %v634 = vpop.f32.mrf.mxu0
      %v635 = vadd.f32 %v349, %v634
      %v636 = vpop.f32.mrf.mxu0
      %637 = vmatprep.mubr.f32.mxu0 0.0
      %638 = vmatmul.mubr.f32.gmra.mxu0 %v428
      %v639 = vpop.f32.mrf.mxu0
      %v640 = vadd.f32 %v349, %v639
      %v641 = vpop.f32.mrf.mxu0
      %642 = vmatprep.mubr.f32.mxu0 0.0
      %643 = vmatmul.mubr.f32.gmra.mxu0 %v431
      %v644 = vpop.f32.mrf.mxu0
      %v645 = vadd.f32 %v349, %v644
      %v646 = vpop.f32.mrf.mxu0
      %647 = vmatprep.mubr.f32.mxu0 0.0
      %648 = vmatmul.mubr.f32.gmra.mxu0 %v434
      %v649 = vpop.f32.mrf.mxu0
      %v650 = vadd.f32 %v349, %v649
      %v651 = vpop.f32.mrf.mxu0
      %652 = vmatprep.mubr.f32.mxu0 0.0
      %653 = vmatmul.mubr.f32.gmra.mxu0 %v437
      %v654 = vpop.f32.mrf.mxu0
      %v655 = vadd.f32 %v349, %v654
      %v656 = vpop.f32.mrf.mxu0
      %657 = vmatprep.mubr.f32.mxu0 0.0
      %658 = vmatmul.mubr.f32.gmra.mxu0 %v440
      %v659 = vpop.f32.mrf.mxu0
      %v660 = vadd.f32 %v349, %v659
      %v661 = vpop.f32.mrf.mxu0
      %662 = vmatprep.mubr.f32.mxu0 0.0
      %663 = vmatmul.mubr.f32.gmra.mxu0 %v443
      %v664 = vpop.f32.mrf.mxu0
      %v665 = vadd.f32 %v349, %v664
      %v666 = vpop.f32.mrf.mxu0
      %667 = vmatprep.mubr.f32.mxu0 0.0
      %668 = vmatmul.mubr.f32.gmra.mxu0 %v446
      %v669 = vpop.f32.mrf.mxu0
      %v670 = vadd.f32 %v349, %v669
      %v671 = vpop.f32.mrf.mxu0
      %672 = vdwg.mxu0
      %v673 = vmax.f32 %v515, 0.0
      %v674 = vmax.f32 %v520, 0.0
      %v675 = vmax.f32 %v525, 0.0
      %v676 = vmax.f32 %v530, 0.0
      %v677 = vmax.f32 %v535, 0.0
      %v678 = vmax.f32 %v540, 0.0
      %v679 = vmax.f32 %v545, 0.0
      %v680 = vmax.f32 %v550, 0.0
      %v681 = vmax.f32 %v555, 0.0
      %v682 = vmax.f32 %v560, 0.0
      %v683 = vmax.f32 %v565, 0.0
      %v684 = vmax.f32 %v570, 0.0
      %v685 = vmax.f32 %v575, 0.0
      %v686 = vmax.f32 %v580, 0.0
      %v687 = vmax.f32 %v585, 0.0
      %v688 = vmax.f32 %v590, 0.0
      %v689 = vmax.f32 %v595, 0.0
      %v690 = vmax.f32 %v600, 0.0
      %v691 = vmax.f32 %v605, 0.0
      %v692 = vmax.f32 %v610, 0.0
      %v693 = vmax.f32 %v615, 0.0
      %v694 = vmax.f32 %v620, 0.0
      %v695 = vmax.f32 %v625, 0.0
      %v696 = vmax.f32 %v630, 0.0
      %v697 = vmax.f32 %v635, 0.0
      %v698 = vmax.f32 %v640, 0.0
      %v699 = vmax.f32 %v645, 0.0
      %v700 = vmax.f32 %v650, 0.0
      %v701 = vmax.f32 %v655, 0.0
      %v702 = vmax.f32 %v660, 0.0
      %v703 = vmax.f32 %v665, 0.0
      %v704 = vmax.f32 %v670, 0.0
      %v705 = vld [vmem:[%s3] sm:$0xf]
      %v706 = vld [vmem:[%s5] sm:$0x1]
      %v708 = vlaneseq
      %v709 = vshrl.u32 %v708, 7
      %v710 = vsub.s32 0, %v709
      %v711 = vrot.slane %v706, %v710
      %vm713 = vcmask 31744
      %v715 = vsel %vm713, %v673, 0
      %v718 = vsel %vm713, %v674, 0
      %v721 = vsel %vm713, %v675, 0
      %v724 = vsel %vm713, %v676, 0
      %v727 = vsel %vm713, %v677, 0
      %v730 = vsel %vm713, %v678, 0
      %v733 = vsel %vm713, %v679, 0
      %v736 = vsel %vm713, %v680, 0
      %v739 = vsel %vm713, %v681, 0
      %v742 = vsel %vm713, %v682, 0
      %v745 = vsel %vm713, %v683, 0
      %v748 = vsel %vm713, %v684, 0
      %v751 = vsel %vm713, %v685, 0
      %v754 = vsel %vm713, %v686, 0
      %v757 = vsel %vm713, %v687, 0
      %v760 = vsel %vm713, %v688, 0
      %v763 = vsel %vm713, %v689, 0
      %v766 = vsel %vm713, %v690, 0
      %v769 = vsel %vm713, %v691, 0
      %v772 = vsel %vm713, %v692, 0
      %v775 = vsel %vm713, %v693, 0
      %v778 = vsel %vm713, %v694, 0
      %v781 = vsel %vm713, %v695, 0
      %v784 = vsel %vm713, %v696, 0
      %v787 = vsel %vm713, %v697, 0
      %v790 = vsel %vm713, %v698, 0
      %v793 = vsel %vm713, %v699, 0
      %v796 = vsel %vm713, %v700, 0
      %v799 = vsel %vm713, %v701, 0
      %v802 = vsel %vm713, %v702, 0
      %v805 = vsel %vm713, %v703, 0
      %v808 = vsel %vm713, %v704, 0
      %vm810 = vcmask 1043456
      %v812 = vsel %vm810, %v705, 0
      %814 = vmatprep.subr.mxu0 0.0
      %815 = vmatpush1.msra.mxu0 0.0
      %816 = vmatprep.subr.mxu0 0.0
      %817 = vmatpush1.msra.mxu0 0.0
      %818 = vmatprep.subr.mxu0 0.0
      %819 = vmatpush1.msra.mxu0 0.0
      %820 = vmatprep.subr.mxu0 0.0
      %821 = vmatpush1.msra.mxu0 0.0
      %822 = vmatprep.subr.mxu0 0.0
      %823 = vmatpush1.msra.mxu0 0.0
      %824 = vmatprep.subr.mxu0 0.0
      %825 = vmatpush1.msra.mxu0 0.0
      %826 = vmatprep.subr.mxu0 0.0
      %827 = vmatpush1.msra.mxu0 0.0
      %828 = vmatprep.subr.mxu0 0.0
      %829 = vmatpush1.msra.mxu0 0.0
      %830 = vmatprep.subr.mxu0 0.0
      %831 = vmatpush1.msra.mxu0 0.0
      %832 = vmatprep.subr.mxu0 0.0
      %833 = vmatpush1.msra.mxu0 0.0
      %834 = vmatprep.subr.mxu0 0.0
      %835 = vmatpush1.msra.mxu0 0.0
      %836 = vmatprep.subr.mxu0 0.0
      %837 = vmatpush1.msra.mxu0 0.0
      %838 = vmatprep.subr.mxu0 0.0
      %839 = vmatpush1.msra.mxu0 0.0
      %840 = vmatprep.subr.mxu0 0.0
      %841 = vmatpush1.msra.mxu0 0.0
      %842 = vmatprep.subr.mxu0 0.0
      %843 = vmatpush1.msra.mxu0 0.0
      %844 = vmatprep.subr.mxu0 0.0
      %845 = vmatpush1.msra.mxu0 %v812
      %846 = vmatprep.subr.mxu0 0.0
      %847 = vmatpush2.msra.mxu0 0.0
      %848 = vmatprep.subr.mxu0 0.0
      %849 = vmatpush2.msra.mxu0 0.0
      %850 = vmatprep.subr.mxu0 0.0
      %851 = vmatpush2.msra.mxu0 0.0
      %852 = vmatprep.subr.mxu0 0.0
      %853 = vmatpush2.msra.mxu0 0.0
      %854 = vmatprep.subr.mxu0 0.0
      %855 = vmatpush2.msra.mxu0 0.0
      %856 = vmatprep.subr.mxu0 0.0
      %857 = vmatpush2.msra.mxu0 0.0
      %858 = vmatprep.subr.mxu0 0.0
      %859 = vmatpush2.msra.mxu0 0.0
      %860 = vmatprep.subr.mxu0 0.0
      %861 = vmatpush2.msra.mxu0 0.0
      %862 = vmatprep.subr.mxu0 0.0
      %863 = vmatpush2.msra.mxu0 0.0
      %864 = vmatprep.subr.mxu0 0.0
      %865 = vmatpush2.msra.mxu0 0.0
      %866 = vmatprep.subr.mxu0 0.0
      %867 = vmatpush2.msra.mxu0 0.0
      %868 = vmatprep.subr.mxu0 0.0
      %869 = vmatpush2.msra.mxu0 0.0
      %870 = vmatprep.subr.mxu0 0.0
      %871 = vmatpush2.msra.mxu0 0.0
      %872 = vmatprep.subr.mxu0 0.0
      %873 = vmatpush2.msra.mxu0 0.0
      %874 = vmatprep.subr.mxu0 0.0
      %875 = vmatpush2.msra.mxu0 0.0
      %876 = vmatprep.subr.mxu0 0.0
      %877 = vmatpush2.msra.mxu0 0.0
      %878 = vmatprep.mubr.f32.mxu0 0.0
      %879 = vmatmul.mubr.f32.gmra.mxu0 %v715
      %v880 = vpop.f32.mrf.mxu0
      %v881 = vadd.f32 %v711, %v880
      %v882 = vpop.f32.mrf.mxu0
      %883 = vmatprep.mubr.f32.mxu0 0.0
      %884 = vmatmul.mubr.f32.gmra.mxu0 %v718
      %v885 = vpop.f32.mrf.mxu0
      %v886 = vadd.f32 %v711, %v885
      %v887 = vpop.f32.mrf.mxu0
      %888 = vmatprep.mubr.f32.mxu0 0.0
      %889 = vmatmul.mubr.f32.gmra.mxu0 %v721
      %v890 = vpop.f32.mrf.mxu0
      %v891 = vadd.f32 %v711, %v890
      %v892 = vpop.f32.mrf.mxu0
      %893 = vmatprep.mubr.f32.mxu0 0.0
      %894 = vmatmul.mubr.f32.gmra.mxu0 %v724
      %v895 = vpop.f32.mrf.mxu0
      %v896 = vadd.f32 %v711, %v895
      %v897 = vpop.f32.mrf.mxu0
      %898 = vmatprep.mubr.f32.mxu0 0.0
      %899 = vmatmul.mubr.f32.gmra.mxu0 %v727
      %v900 = vpop.f32.mrf.mxu0
      %v901 = vadd.f32 %v711, %v900
      %v902 = vpop.f32.mrf.mxu0
      %903 = vmatprep.mubr.f32.mxu0 0.0
      %904 = vmatmul.mubr.f32.gmra.mxu0 %v730
      %v905 = vpop.f32.mrf.mxu0
      %v906 = vadd.f32 %v711, %v905
      %v907 = vpop.f32.mrf.mxu0
      %908 = vmatprep.mubr.f32.mxu0 0.0
      %909 = vmatmul.mubr.f32.gmra.mxu0 %v733
      %v910 = vpop.f32.mrf.mxu0
      %v911 = vadd.f32 %v711, %v910
      %v912 = vpop.f32.mrf.mxu0
      %913 = vmatprep.mubr.f32.mxu0 0.0
      %914 = vmatmul.mubr.f32.gmra.mxu0 %v736
      %v915 = vpop.f32.mrf.mxu0
      %v916 = vadd.f32 %v711, %v915
      %v917 = vpop.f32.mrf.mxu0
      %918 = vmatprep.mubr.f32.mxu0 0.0
      %919 = vmatmul.mubr.f32.gmra.mxu0 %v739
      %v920 = vpop.f32.mrf.mxu0
      %v921 = vadd.f32 %v711, %v920
      %v922 = vpop.f32.mrf.mxu0
      %923 = vmatprep.mubr.f32.mxu0 0.0
      %924 = vmatmul.mubr.f32.gmra.mxu0 %v742
      %v925 = vpop.f32.mrf.mxu0
      %v926 = vadd.f32 %v711, %v925
      %v927 = vpop.f32.mrf.mxu0
      %928 = vmatprep.mubr.f32.mxu0 0.0
      %929 = vmatmul.mubr.f32.gmra.mxu0 %v745
      %v930 = vpop.f32.mrf.mxu0
      %v931 = vadd.f32 %v711, %v930
      %v932 = vpop.f32.mrf.mxu0
      %933 = vmatprep.mubr.f32.mxu0 0.0
      %934 = vmatmul.mubr.f32.gmra.mxu0 %v748
      %v935 = vpop.f32.mrf.mxu0
      %v936 = vadd.f32 %v711, %v935
      %v937 = vpop.f32.mrf.mxu0
      %938 = vmatprep.mubr.f32.mxu0 0.0
      %939 = vmatmul.mubr.f32.gmra.mxu0 %v751
      %v940 = vpop.f32.mrf.mxu0
      %v941 = vadd.f32 %v711, %v940
      %v942 = vpop.f32.mrf.mxu0
      %943 = vmatprep.mubr.f32.mxu0 0.0
      %944 = vmatmul.mubr.f32.gmra.mxu0 %v754
      %v945 = vpop.f32.mrf.mxu0
      %v946 = vadd.f32 %v711, %v945
      %v947 = vpop.f32.mrf.mxu0
      %948 = vmatprep.mubr.f32.mxu0 0.0
      %949 = vmatmul.mubr.f32.gmra.mxu0 %v757
      %v950 = vpop.f32.mrf.mxu0
      %v951 = vadd.f32 %v711, %v950
      %v952 = vpop.f32.mrf.mxu0
      %953 = vmatprep.mubr.f32.mxu0 0.0
      %954 = vmatmul.mubr.f32.gmra.mxu0 %v760
      %v955 = vpop.f32.mrf.mxu0
      %v956 = vadd.f32 %v711, %v955
      %v957 = vpop.f32.mrf.mxu0
      %958 = vmatprep.mubr.f32.mxu0 0.0
      %959 = vmatmul.mubr.f32.gmra.mxu0 %v763
      %v960 = vpop.f32.mrf.mxu0
      %v961 = vadd.f32 %v711, %v960
      %v962 = vpop.f32.mrf.mxu0
      %963 = vmatprep.mubr.f32.mxu0 0.0
      %964 = vmatmul.mubr.f32.gmra.mxu0 %v766
      %v965 = vpop.f32.mrf.mxu0
      %v966 = vadd.f32 %v711, %v965
      %v967 = vpop.f32.mrf.mxu0
      %968 = vmatprep.mubr.f32.mxu0 0.0
      %969 = vmatmul.mubr.f32.gmra.mxu0 %v769
      %v970 = vpop.f32.mrf.mxu0
      %v971 = vadd.f32 %v711, %v970
      %v972 = vpop.f32.mrf.mxu0
      %973 = vmatprep.mubr.f32.mxu0 0.0
      %974 = vmatmul.mubr.f32.gmra.mxu0 %v772
      %v975 = vpop.f32.mrf.mxu0
      %v976 = vadd.f32 %v711, %v975
      %v977 = vpop.f32.mrf.mxu0
      %978 = vmatprep.mubr.f32.mxu0 0.0
      %979 = vmatmul.mubr.f32.gmra.mxu0 %v775
      %v980 = vpop.f32.mrf.mxu0
      %v981 = vadd.f32 %v711, %v980
      %v982 = vpop.f32.mrf.mxu0
      %983 = vmatprep.mubr.f32.mxu0 0.0
      %984 = vmatmul.mubr.f32.gmra.mxu0 %v778
      %v985 = vpop.f32.mrf.mxu0
      %v986 = vadd.f32 %v711, %v985
      %v987 = vpop.f32.mrf.mxu0
      %988 = vmatprep.mubr.f32.mxu0 0.0
      %989 = vmatmul.mubr.f32.gmra.mxu0 %v781
      %v990 = vpop.f32.mrf.mxu0
      %v991 = vadd.f32 %v711, %v990
      %v992 = vpop.f32.mrf.mxu0
      %993 = vmatprep.mubr.f32.mxu0 0.0
      %994 = vmatmul.mubr.f32.gmra.mxu0 %v784
      %v995 = vpop.f32.mrf.mxu0
      %v996 = vadd.f32 %v711, %v995
      %v997 = vpop.f32.mrf.mxu0
      %998 = vmatprep.mubr.f32.mxu0 0.0
      %999 = vmatmul.mubr.f32.gmra.mxu0 %v787
      %v1000 = vpop.f32.mrf.mxu0
      %v1001 = vadd.f32 %v711, %v1000
      %v1002 = vpop.f32.mrf.mxu0
      %1003 = vmatprep.mubr.f32.mxu0 0.0
      %1004 = vmatmul.mubr.f32.gmra.mxu0 %v790
      %v1005 = vpop.f32.mrf.mxu0
      %v1006 = vadd.f32 %v711, %v1005
      %v1007 = vpop.f32.mrf.mxu0
      %1008 = vmatprep.mubr.f32.mxu0 0.0
      %1009 = vmatmul.mubr.f32.gmra.mxu0 %v793
      %v1010 = vpop.f32.mrf.mxu0
      %v1011 = vadd.f32 %v711, %v1010
      %v1012 = vpop.f32.mrf.mxu0
      %1013 = vmatprep.mubr.f32.mxu0 0.0
      %1014 = vmatmul.mubr.f32.gmra.mxu0 %v796
      %v1015 = vpop.f32.mrf.mxu0
      %v1016 = vadd.f32 %v711, %v1015
      %v1017 = vpop.f32.mrf.mxu0
      %1018 = vmatprep.mubr.f32.mxu0 0.0
      %1019 = vmatmul.mubr.f32.gmra.mxu0 %v799
      %v1020 = vpop.f32.mrf.mxu0
      %v1021 = vadd.f32 %v711, %v1020
      %v1022 = vpop.f32.mrf.mxu0
      %1023 = vmatprep.mubr.f32.mxu0 0.0
      %1024 = vmatmul.mubr.f32.gmra.mxu0 %v802
      %v1025 = vpop.f32.mrf.mxu0
      %v1026 = vadd.f32 %v711, %v1025
      %v1027 = vpop.f32.mrf.mxu0
      %1028 = vmatprep.mubr.f32.mxu0 0.0
      %1029 = vmatmul.mubr.f32.gmra.mxu0 %v805
      %v1030 = vpop.f32.mrf.mxu0
      %v1031 = vadd.f32 %v711, %v1030
      %v1032 = vpop.f32.mrf.mxu0
      %1033 = vmatprep.mubr.f32.mxu0 0.0
      %1034 = vmatmul.mubr.f32.gmra.mxu0 %v808
      %v1035 = vpop.f32.mrf.mxu0
      %v1036 = vadd.f32 %v711, %v1035
      %v1037 = vpop.f32.mrf.mxu0
      %1038 = vdwg.mxu0
      %v1039 = vmax.f32 %v881, 0.0
      %v1040 = vmax.f32 %v886, 0.0
      %v1041 = vmax.f32 %v891, 0.0
      %v1042 = vmax.f32 %v896, 0.0
      %v1043 = vmax.f32 %v901, 0.0
      %v1044 = vmax.f32 %v906, 0.0
      %v1045 = vmax.f32 %v911, 0.0
      %v1046 = vmax.f32 %v916, 0.0
      %v1047 = vmax.f32 %v921, 0.0
      %v1048 = vmax.f32 %v926, 0.0
      %v1049 = vmax.f32 %v931, 0.0
      %v1050 = vmax.f32 %v936, 0.0
      %v1051 = vmax.f32 %v941, 0.0
      %v1052 = vmax.f32 %v946, 0.0
      %v1053 = vmax.f32 %v951, 0.0
      %v1054 = vmax.f32 %v956, 0.0
      %v1055 = vmax.f32 %v961, 0.0
      %v1056 = vmax.f32 %v966, 0.0
      %v1057 = vmax.f32 %v971, 0.0
      %v1058 = vmax.f32 %v976, 0.0
      %v1059 = vmax.f32 %v981, 0.0
      %v1060 = vmax.f32 %v986, 0.0
      %v1061 = vmax.f32 %v991, 0.0
      %v1062 = vmax.f32 %v996, 0.0
      %v1063 = vmax.f32 %v1001, 0.0
      %v1064 = vmax.f32 %v1006, 0.0
      %v1065 = vmax.f32 %v1011, 0.0
      %v1066 = vmax.f32 %v1016, 0.0
      %v1067 = vmax.f32 %v1021, 0.0
      %v1068 = vmax.f32 %v1026, 0.0
      %v1069 = vmax.f32 %v1031, 0.0
      %v1070 = vmax.f32 %v1036, 0.0
      %v1071 = vld [vmem:[%s6] sm:$0xff]
      %v1072 = vld [vmem:[%s7] sm:$0x1]
      %v1074 = vlaneseq
      %v1075 = vshrl.u32 %v1074, 7
      %v1076 = vsub.s32 0, %v1075
      %v1077 = vrot.slane %v1072, %v1076
      %v1080 = vsel %vm351, %v1039, 0
      %v1083 = vsel %vm351, %v1040, 0
      %v1086 = vsel %vm351, %v1041, 0
      %v1089 = vsel %vm351, %v1042, 0
      %v1092 = vsel %vm351, %v1043, 0
      %v1095 = vsel %vm351, %v1044, 0
      %v1098 = vsel %vm351, %v1045, 0
      %v1101 = vsel %vm351, %v1046, 0
      %v1104 = vsel %vm351, %v1047, 0
      %v1107 = vsel %vm351, %v1048, 0
      %v1110 = vsel %vm351, %v1049, 0
      %v1113 = vsel %vm351, %v1050, 0
      %v1116 = vsel %vm351, %v1051, 0
      %v1119 = vsel %vm351, %v1052, 0
      %v1122 = vsel %vm351, %v1053, 0
      %v1125 = vsel %vm351, %v1054, 0
      %v1128 = vsel %vm351, %v1055, 0
      %v1131 = vsel %vm351, %v1056, 0
      %v1134 = vsel %vm351, %v1057, 0
      %v1137 = vsel %vm351, %v1058, 0
      %v1140 = vsel %vm351, %v1059, 0
      %v1143 = vsel %vm351, %v1060, 0
      %v1146 = vsel %vm351, %v1061, 0
      %v1149 = vsel %vm351, %v1062, 0
      %v1152 = vsel %vm351, %v1063, 0
      %v1155 = vsel %vm351, %v1064, 0
      %v1158 = vsel %vm351, %v1065, 0
      %v1161 = vsel %vm351, %v1066, 0
      %v1164 = vsel %vm351, %v1067, 0
      %v1167 = vsel %vm351, %v1068, 0
      %v1170 = vsel %vm351, %v1069, 0
      %v1173 = vsel %vm351, %v1070, 0
      %1175 = vmatprep.subr.mxu0 0.0
      %1176 = vmatpush1.msra.mxu0 0.0
      %1177 = vmatprep.subr.mxu0 0.0
      %1178 = vmatpush1.msra.mxu0 0.0
      %1179 = vmatprep.subr.mxu0 0.0
      %1180 = vmatpush1.msra.mxu0 0.0
      %1181 = vmatprep.subr.mxu0 0.0
      %1182 = vmatpush1.msra.mxu0 0.0
      %1183 = vmatprep.subr.mxu0 0.0
      %1184 = vmatpush1.msra.mxu0 0.0
      %1185 = vmatprep.subr.mxu0 0.0
      %1186 = vmatpush1.msra.mxu0 0.0
      %1187 = vmatprep.subr.mxu0 0.0
      %1188 = vmatpush1.msra.mxu0 0.0
      %1189 = vmatprep.subr.mxu0 0.0
      %1190 = vmatpush1.msra.mxu0 0.0
      %1191 = vmatprep.subr.mxu0 0.0
      %1192 = vmatpush1.msra.mxu0 0.0
      %1193 = vmatprep.subr.mxu0 0.0
      %1194 = vmatpush1.msra.mxu0 0.0
      %1195 = vmatprep.subr.mxu0 0.0
      %1196 = vmatpush1.msra.mxu0 0.0
      %1197 = vmatprep.subr.mxu0 0.0
      %1198 = vmatpush1.msra.mxu0 0.0
      %1199 = vmatprep.subr.mxu0 0.0
      %1200 = vmatpush1.msra.mxu0 0.0
      %1201 = vmatprep.subr.mxu0 0.0
      %1202 = vmatpush1.msra.mxu0 0.0
      %1203 = vmatprep.subr.mxu0 0.0
      %1204 = vmatpush1.msra.mxu0 0.0
      %1205 = vmatprep.subr.mxu0 0.0
      %1206 = vmatpush1.msra.mxu0 %v1071
      %1207 = vmatprep.subr.mxu0 0.0
      %1208 = vmatpush2.msra.mxu0 0.0
      %1209 = vmatprep.subr.mxu0 0.0
      %1210 = vmatpush2.msra.mxu0 0.0
      %1211 = vmatprep.subr.mxu0 0.0
      %1212 = vmatpush2.msra.mxu0 0.0
      %1213 = vmatprep.subr.mxu0 0.0
      %1214 = vmatpush2.msra.mxu0 0.0
      %1215 = vmatprep.subr.mxu0 0.0
      %1216 = vmatpush2.msra.mxu0 0.0
      %1217 = vmatprep.subr.mxu0 0.0
      %1218 = vmatpush2.msra.mxu0 0.0
      %1219 = vmatprep.subr.mxu0 0.0
      %1220 = vmatpush2.msra.mxu0 0.0
      %1221 = vmatprep.subr.mxu0 0.0
      %1222 = vmatpush2.msra.mxu0 0.0
      %1223 = vmatprep.subr.mxu0 0.0
      %1224 = vmatpush2.msra.mxu0 0.0
      %1225 = vmatprep.subr.mxu0 0.0
      %1226 = vmatpush2.msra.mxu0 0.0
      %1227 = vmatprep.subr.mxu0 0.0
      %1228 = vmatpush2.msra.mxu0 0.0
      %1229 = vmatprep.subr.mxu0 0.0
      %1230 = vmatpush2.msra.mxu0 0.0
      %1231 = vmatprep.subr.mxu0 0.0
      %1232 = vmatpush2.msra.mxu0 0.0
      %1233 = vmatprep.subr.mxu0 0.0
      %1234 = vmatpush2.msra.mxu0 0.0
      %1235 = vmatprep.subr.mxu0 0.0
      %1236 = vmatpush2.msra.mxu0 0.0
      %1237 = vmatprep.subr.mxu0 0.0
      %1238 = vmatpush2.msra.mxu0 0.0
      %1239 = vmatprep.mubr.f32.mxu0 0.0
      %1240 = vmatmul.mubr.f32.gmra.mxu0 %v1080
      %v1241 = vpop.f32.mrf.mxu0
      %v1242 = vadd.f32 %v1077, %v1241
      %v1243 = vpop.f32.mrf.mxu0
      %1244 = vmatprep.mubr.f32.mxu0 0.0
      %1245 = vmatmul.mubr.f32.gmra.mxu0 %v1083
      %v1246 = vpop.f32.mrf.mxu0
      %v1247 = vadd.f32 %v1077, %v1246
      %v1248 = vpop.f32.mrf.mxu0
      %1249 = vmatprep.mubr.f32.mxu0 0.0
      %1250 = vmatmul.mubr.f32.gmra.mxu0 %v1086
      %v1251 = vpop.f32.mrf.mxu0
      %v1252 = vadd.f32 %v1077, %v1251
      %v1253 = vpop.f32.mrf.mxu0
      %1254 = vmatprep.mubr.f32.mxu0 0.0
      %1255 = vmatmul.mubr.f32.gmra.mxu0 %v1089
      %v1256 = vpop.f32.mrf.mxu0
      %v1257 = vadd.f32 %v1077, %v1256
      %v1258 = vpop.f32.mrf.mxu0
      %1259 = vmatprep.mubr.f32.mxu0 0.0
      %1260 = vmatmul.mubr.f32.gmra.mxu0 %v1092
      %v1261 = vpop.f32.mrf.mxu0
      %v1262 = vadd.f32 %v1077, %v1261
      %v1263 = vpop.f32.mrf.mxu0
      %1264 = vmatprep.mubr.f32.mxu0 0.0
      %1265 = vmatmul.mubr.f32.gmra.mxu0 %v1095
      %v1266 = vpop.f32.mrf.mxu0
      %v1267 = vadd.f32 %v1077, %v1266
      %v1268 = vpop.f32.mrf.mxu0
      %1269 = vmatprep.mubr.f32.mxu0 0.0
      %1270 = vmatmul.mubr.f32.gmra.mxu0 %v1098
      %v1271 = vpop.f32.mrf.mxu0
      %v1272 = vadd.f32 %v1077, %v1271
      %v1273 = vpop.f32.mrf.mxu0
      %1274 = vmatprep.mubr.f32.mxu0 0.0
      %1275 = vmatmul.mubr.f32.gmra.mxu0 %v1101
      %v1276 = vpop.f32.mrf.mxu0
      %v1277 = vadd.f32 %v1077, %v1276
      %v1278 = vpop.f32.mrf.mxu0
      %1279 = vmatprep.mubr.f32.mxu0 0.0
      %1280 = vmatmul.mubr.f32.gmra.mxu0 %v1104
      %v1281 = vpop.f32.mrf.mxu0
      %v1282 = vadd.f32 %v1077, %v1281
      %v1283 = vpop.f32.mrf.mxu0
      %1284 = vmatprep.mubr.f32.mxu0 0.0
      %1285 = vmatmul.mubr.f32.gmra.mxu0 %v1107
      %v1286 = vpop.f32.mrf.mxu0
      %v1287 = vadd.f32 %v1077, %v1286
      %v1288 = vpop.f32.mrf.mxu0
      %1289 = vmatprep.mubr.f32.mxu0 0.0
      %1290 = vmatmul.mubr.f32.gmra.mxu0 %v1110
      %v1291 = vpop.f32.mrf.mxu0
      %v1292 = vadd.f32 %v1077, %v1291
      %v1293 = vpop.f32.mrf.mxu0
      %1294 = vmatprep.mubr.f32.mxu0 0.0
      %1295 = vmatmul.mubr.f32.gmra.mxu0 %v1113
      %v1296 = vpop.f32.mrf.mxu0
      %v1297 = vadd.f32 %v1077, %v1296
      %v1298 = vpop.f32.mrf.mxu0
      %1299 = vmatprep.mubr.f32.mxu0 0.0
      %1300 = vmatmul.mubr.f32.gmra.mxu0 %v1116
      %v1301 = vpop.f32.mrf.mxu0
      %v1302 = vadd.f32 %v1077, %v1301
      %v1303 = vpop.f32.mrf.mxu0
      %1304 = vmatprep.mubr.f32.mxu0 0.0
      %1305 = vmatmul.mubr.f32.gmra.mxu0 %v1119
      %v1306 = vpop.f32.mrf.mxu0
      %v1307 = vadd.f32 %v1077, %v1306
      %v1308 = vpop.f32.mrf.mxu0
      %1309 = vmatprep.mubr.f32.mxu0 0.0
      %1310 = vmatmul.mubr.f32.gmra.mxu0 %v1122
      %v1311 = vpop.f32.mrf.mxu0
      %v1312 = vadd.f32 %v1077, %v1311
      %v1313 = vpop.f32.mrf.mxu0
      %1314 = vmatprep.mubr.f32.mxu0 0.0
      %1315 = vmatmul.mubr.f32.gmra.mxu0 %v1125
      %v1316 = vpop.f32.mrf.mxu0
      %v1317 = vadd.f32 %v1077, %v1316
      %v1318 = vpop.f32.mrf.mxu0
      %1319 = vmatprep.mubr.f32.mxu0 0.0
      %1320 = vmatmul.mubr.f32.gmra.mxu0 %v1128
      %v1321 = vpop.f32.mrf.mxu0
      %v1322 = vadd.f32 %v1077, %v1321
      %v1323 = vpop.f32.mrf.mxu0
      %1324 = vmatprep.mubr.f32.mxu0 0.0
      %1325 = vmatmul.mubr.f32.gmra.mxu0 %v1131
      %v1326 = vpop.f32.mrf.mxu0
      %v1327 = vadd.f32 %v1077, %v1326
      %v1328 = vpop.f32.mrf.mxu0
      %1329 = vmatprep.mubr.f32.mxu0 0.0
      %1330 = vmatmul.mubr.f32.gmra.mxu0 %v1134
      %v1331 = vpop.f32.mrf.mxu0
      %v1332 = vadd.f32 %v1077, %v1331
      %v1333 = vpop.f32.mrf.mxu0
      %1334 = vmatprep.mubr.f32.mxu0 0.0
      %1335 = vmatmul.mubr.f32.gmra.mxu0 %v1137
      %v1336 = vpop.f32.mrf.mxu0
      %v1337 = vadd.f32 %v1077, %v1336
      %v1338 = vpop.f32.mrf.mxu0
      %1339 = vmatprep.mubr.f32.mxu0 0.0
      %1340 = vmatmul.mubr.f32.gmra.mxu0 %v1140
      %v1341 = vpop.f32.mrf.mxu0
      %v1342 = vadd.f32 %v1077, %v1341
      %v1343 = vpop.f32.mrf.mxu0
      %1344 = vmatprep.mubr.f32.mxu0 0.0
      %1345 = vmatmul.mubr.f32.gmra.mxu0 %v1143
      %v1346 = vpop.f32.mrf.mxu0
      %v1347 = vadd.f32 %v1077, %v1346
      %v1348 = vpop.f32.mrf.mxu0
      %1349 = vmatprep.mubr.f32.mxu0 0.0
      %1350 = vmatmul.mubr.f32.gmra.mxu0 %v1146
      %v1351 = vpop.f32.mrf.mxu0
      %v1352 = vadd.f32 %v1077, %v1351
      %v1353 = vpop.f32.mrf.mxu0
      %1354 = vmatprep.mubr.f32.mxu0 0.0
      %1355 = vmatmul.mubr.f32.gmra.mxu0 %v1149
      %v1356 = vpop.f32.mrf.mxu0
      %v1357 = vadd.f32 %v1077, %v1356
      %v1358 = vpop.f32.mrf.mxu0
      %1359 = vmatprep.mubr.f32.mxu0 0.0
      %1360 = vmatmul.mubr.f32.gmra.mxu0 %v1152
      %v1361 = vpop.f32.mrf.mxu0
      %v1362 = vadd.f32 %v1077, %v1361
      %v1363 = vpop.f32.mrf.mxu0
      %1364 = vmatprep.mubr.f32.mxu0 0.0
      %1365 = vmatmul.mubr.f32.gmra.mxu0 %v1155
      %v1366 = vpop.f32.mrf.mxu0
      %v1367 = vadd.f32 %v1077, %v1366
      %v1368 = vpop.f32.mrf.mxu0
      %1369 = vmatprep.mubr.f32.mxu0 0.0
      %1370 = vmatmul.mubr.f32.gmra.mxu0 %v1158
      %v1371 = vpop.f32.mrf.mxu0
      %v1372 = vadd.f32 %v1077, %v1371
      %v1373 = vpop.f32.mrf.mxu0
      %1374 = vmatprep.mubr.f32.mxu0 0.0
      %1375 = vmatmul.mubr.f32.gmra.mxu0 %v1161
      %v1376 = vpop.f32.mrf.mxu0
      %v1377 = vadd.f32 %v1077, %v1376
      %v1378 = vpop.f32.mrf.mxu0
      %1379 = vmatprep.mubr.f32.mxu0 0.0
      %1380 = vmatmul.mubr.f32.gmra.mxu0 %v1164
      %v1381 = vpop.f32.mrf.mxu0
      %v1382 = vadd.f32 %v1077, %v1381
      %v1383 = vpop.f32.mrf.mxu0
      %1384 = vmatprep.mubr.f32.mxu0 0.0
      %1385 = vmatmul.mubr.f32.gmra.mxu0 %v1167
      %v1386 = vpop.f32.mrf.mxu0
      %v1387 = vadd.f32 %v1077, %v1386
      %v1388 = vpop.f32.mrf.mxu0
      %1389 = vmatprep.mubr.f32.mxu0 0.0
      %1390 = vmatmul.mubr.f32.gmra.mxu0 %v1170
      %v1391 = vpop.f32.mrf.mxu0
      %v1392 = vadd.f32 %v1077, %v1391
      %v1393 = vpop.f32.mrf.mxu0
      %1394 = vmatprep.mubr.f32.mxu0 0.0
      %1395 = vmatmul.mubr.f32.gmra.mxu0 %v1173
      %v1396 = vpop.f32.mrf.mxu0
      %v1397 = vadd.f32 %v1077, %v1396
      %v1398 = vpop.f32.mrf.mxu0
      %1399 = vdwg.mxu0
      %v1400 = vmax.f32 %v1242, 0.0
      %v1401 = vmax.f32 %v1247, 0.0
      %v1402 = vmax.f32 %v1252, 0.0
      %v1403 = vmax.f32 %v1257, 0.0
      %v1404 = vmax.f32 %v1262, 0.0
      %v1405 = vmax.f32 %v1267, 0.0
      %v1406 = vmax.f32 %v1272, 0.0
      %v1407 = vmax.f32 %v1277, 0.0
      %v1408 = vmax.f32 %v1282, 0.0
      %v1409 = vmax.f32 %v1287, 0.0
      %v1410 = vmax.f32 %v1292, 0.0
      %v1411 = vmax.f32 %v1297, 0.0
      %v1412 = vmax.f32 %v1302, 0.0
      %v1413 = vmax.f32 %v1307, 0.0
      %v1414 = vmax.f32 %v1312, 0.0
      %v1415 = vmax.f32 %v1317, 0.0
      %v1416 = vmax.f32 %v1322, 0.0
      %v1417 = vmax.f32 %v1327, 0.0
      %v1418 = vmax.f32 %v1332, 0.0
      %v1419 = vmax.f32 %v1337, 0.0
      %v1420 = vmax.f32 %v1342, 0.0
      %v1421 = vmax.f32 %v1347, 0.0
      %v1422 = vmax.f32 %v1352, 0.0
      %v1423 = vmax.f32 %v1357, 0.0
      %v1424 = vmax.f32 %v1362, 0.0
      %v1425 = vmax.f32 %v1367, 0.0
      %v1426 = vmax.f32 %v1372, 0.0
      %v1427 = vmax.f32 %v1377, 0.0
      %v1428 = vmax.f32 %v1382, 0.0
      %v1429 = vmax.f32 %v1387, 0.0
      %v1430 = vmax.f32 %v1392, 0.0
      %v1431 = vmax.f32 %v1397, 0.0
      %vm1432 = vcmask 130048
      %1433 = vst.msk [vmem:[%s309] sm:$0xff] %vm1432, %v1400
      %1434 = vst.msk [vmem:[%s309 + $0x8] sm:$0xff] %vm1432, %v1401
      %1435 = vst.msk [vmem:[%s309 + $0x20] sm:$0xff] %vm1432, %v1402
      %1436 = vst.msk [vmem:[%s309 + $0x28] sm:$0xff] %vm1432, %v1403
      %1437 = vst.msk [vmem:[%s309 + $0x40] sm:$0xff] %vm1432, %v1404
      %1438 = vst.msk [vmem:[%s309 + $0x48] sm:$0xff] %vm1432, %v1405
      %1439 = vst.msk [vmem:[%s309 + $0x60] sm:$0xff] %vm1432, %v1406
      %1440 = vst.msk [vmem:[%s309 + $0x68] sm:$0xff] %vm1432, %v1407
      %1441 = vst.msk [vmem:[%s309 + $0x80] sm:$0xff] %vm1432, %v1408
      %1442 = vst.msk [vmem:[%s309 + $0x88] sm:$0xff] %vm1432, %v1409
      %1443 = vst.msk [vmem:[%s309 + $0xa0] sm:$0xff] %vm1432, %v1410
      %1444 = vst.msk [vmem:[%s309 + $0xa8] sm:$0xff] %vm1432, %v1411
      %1445 = vst.msk [vmem:[%s309 + $0xc0] sm:$0xff] %vm1432, %v1412
      %1446 = vst.msk [vmem:[%s309 + $0xc8] sm:$0xff] %vm1432, %v1413
      %1447 = vst.msk [vmem:[%s309 + $0xe0] sm:$0xff] %vm1432, %v1414
      %1448 = vst.msk [vmem:[%s309 + $0xe8] sm:$0xff] %vm1432, %v1415
      %1449 = vst.msk [vmem:[%s309 + $0x100] sm:$0xff] %vm1432, %v1416
      %1450 = vst.msk [vmem:[%s309 + $0x108] sm:$0xff] %vm1432, %v1417
      %1451 = vst.msk [vmem:[%s309 + $0x120] sm:$0xff] %vm1432, %v1418
      %1452 = vst.msk [vmem:[%s309 + $0x128] sm:$0xff] %vm1432, %v1419
      %1453 = vst.msk [vmem:[%s309 + $0x140] sm:$0xff] %vm1432, %v1420
      %1454 = vst.msk [vmem:[%s309 + $0x148] sm:$0xff] %vm1432, %v1421
      %1455 = vst.msk [vmem:[%s309 + $0x160] sm:$0xff] %vm1432, %v1422
      %1456 = vst.msk [vmem:[%s309 + $0x168] sm:$0xff] %vm1432, %v1423
      %1457 = vst.msk [vmem:[%s309 + $0x180] sm:$0xff] %vm1432, %v1424
      %1458 = vst.msk [vmem:[%s309 + $0x188] sm:$0xff] %vm1432, %v1425
      %1459 = vst.msk [vmem:[%s309 + $0x1a0] sm:$0xff] %vm1432, %v1426
      %1460 = vst.msk [vmem:[%s309 + $0x1a8] sm:$0xff] %vm1432, %v1427
      %1461 = vst.msk [vmem:[%s309 + $0x1c0] sm:$0xff] %vm1432, %v1428
      %1462 = vst.msk [vmem:[%s309 + $0x1c8] sm:$0xff] %vm1432, %v1429
      %1463 = vst.msk [vmem:[%s309 + $0x1e0] sm:$0xff] %vm1432, %v1430
      %1464 = vst.msk [vmem:[%s309 + $0x1e8] sm:$0xff] %vm1432, %v1431
      %v1465 = vld [vmem:[%s4] sm:$0xf]
      %v1466 = vld [vmem:[%s5] sm:$0x1]
      %v1468 = vlaneseq
      %v1469 = vshrl.u32 %v1468, 7
      %v1470 = vsub.s32 0, %v1469
      %v1471 = vrot.slane %v1466, %v1470
      %v1474 = vsel %vm810, %v1465, 0
      %1476 = vmatprep.subr.mxu0 0.0
      %1477 = vmatpush1.msra.mxu0 0.0
      %1478 = vmatprep.subr.mxu0 0.0
      %1479 = vmatpush1.msra.mxu0 0.0
      %1480 = vmatprep.subr.mxu0 0.0
      %1481 = vmatpush1.msra.mxu0 0.0
      %1482 = vmatprep.subr.mxu0 0.0
      %1483 = vmatpush1.msra.mxu0 0.0
      %1484 = vmatprep.subr.mxu0 0.0
      %1485 = vmatpush1.msra.mxu0 0.0
      %1486 = vmatprep.subr.mxu0 0.0
      %1487 = vmatpush1.msra.mxu0 0.0
      %1488 = vmatprep.subr.mxu0 0.0
      %1489 = vmatpush1.msra.mxu0 0.0
      %1490 = vmatprep.subr.mxu0 0.0
      %1491 = vmatpush1.msra.mxu0 0.0
      %1492 = vmatprep.subr.mxu0 0.0
      %1493 = vmatpush1.msra.mxu0 0.0
      %1494 = vmatprep.subr.mxu0 0.0
      %1495 = vmatpush1.msra.mxu0 0.0
      %1496 = vmatprep.subr.mxu0 0.0
      %1497 = vmatpush1.msra.mxu0 0.0
      %1498 = vmatprep.subr.mxu0 0.0
      %1499 = vmatpush1.msra.mxu0 0.0
      %1500 = vmatprep.subr.mxu0 0.0
      %1501 = vmatpush1.msra.mxu0 0.0
      %1502 = vmatprep.subr.mxu0 0.0
      %1503 = vmatpush1.msra.mxu0 0.0
      %1504 = vmatprep.subr.mxu0 0.0
      %1505 = vmatpush1.msra.mxu0 0.0
      %1506 = vmatprep.subr.mxu0 0.0
      %1507 = vmatpush1.msra.mxu0 %v1474
      %1508 = vmatprep.subr.mxu0 0.0
      %1509 = vmatpush2.msra.mxu0 0.0
      %1510 = vmatprep.subr.mxu0 0.0
      %1511 = vmatpush2.msra.mxu0 0.0
      %1512 = vmatprep.subr.mxu0 0.0
      %1513 = vmatpush2.msra.mxu0 0.0
      %1514 = vmatprep.subr.mxu0 0.0
      %1515 = vmatpush2.msra.mxu0 0.0
      %1516 = vmatprep.subr.mxu0 0.0
      %1517 = vmatpush2.msra.mxu0 0.0
      %1518 = vmatprep.subr.mxu0 0.0
      %1519 = vmatpush2.msra.mxu0 0.0
      %1520 = vmatprep.subr.mxu0 0.0
      %1521 = vmatpush2.msra.mxu0 0.0
      %1522 = vmatprep.subr.mxu0 0.0
      %1523 = vmatpush2.msra.mxu0 0.0
      %1524 = vmatprep.subr.mxu0 0.0
      %1525 = vmatpush2.msra.mxu0 0.0
      %1526 = vmatprep.subr.mxu0 0.0
      %1527 = vmatpush2.msra.mxu0 0.0
      %1528 = vmatprep.subr.mxu0 0.0
      %1529 = vmatpush2.msra.mxu0 0.0
      %1530 = vmatprep.subr.mxu0 0.0
      %1531 = vmatpush2.msra.mxu0 0.0
      %1532 = vmatprep.subr.mxu0 0.0
      %1533 = vmatpush2.msra.mxu0 0.0
      %1534 = vmatprep.subr.mxu0 0.0
      %1535 = vmatpush2.msra.mxu0 0.0
      %1536 = vmatprep.subr.mxu0 0.0
      %1537 = vmatpush2.msra.mxu0 0.0
      %1538 = vmatprep.subr.mxu0 0.0
      %1539 = vmatpush2.msra.mxu0 0.0
      %1540 = vmatprep.mubr.f32.mxu0 0.0
      %1541 = vmatmul.mubr.f32.gmra.mxu0 %v715
      %v1542 = vpop.f32.mrf.mxu0
      %v1543 = vadd.f32 %v1471, %v1542
      %v1544 = vpop.f32.mrf.mxu0
      %1545 = vmatprep.mubr.f32.mxu0 0.0
      %1546 = vmatmul.mubr.f32.gmra.mxu0 %v718
      %v1547 = vpop.f32.mrf.mxu0
      %v1548 = vadd.f32 %v1471, %v1547
      %v1549 = vpop.f32.mrf.mxu0
      %1550 = vmatprep.mubr.f32.mxu0 0.0
      %1551 = vmatmul.mubr.f32.gmra.mxu0 %v721
      %v1552 = vpop.f32.mrf.mxu0
      %v1553 = vadd.f32 %v1471, %v1552
      %v1554 = vpop.f32.mrf.mxu0
      %1555 = vmatprep.mubr.f32.mxu0 0.0
      %1556 = vmatmul.mubr.f32.gmra.mxu0 %v724
      %v1557 = vpop.f32.mrf.mxu0
      %v1558 = vadd.f32 %v1471, %v1557
      %v1559 = vpop.f32.mrf.mxu0
      %1560 = vmatprep.mubr.f32.mxu0 0.0
      %1561 = vmatmul.mubr.f32.gmra.mxu0 %v727
      %v1562 = vpop.f32.mrf.mxu0
      %v1563 = vadd.f32 %v1471, %v1562
      %v1564 = vpop.f32.mrf.mxu0
      %1565 = vmatprep.mubr.f32.mxu0 0.0
      %1566 = vmatmul.mubr.f32.gmra.mxu0 %v730
      %v1567 = vpop.f32.mrf.mxu0
      %v1568 = vadd.f32 %v1471, %v1567
      %v1569 = vpop.f32.mrf.mxu0
      %1570 = vmatprep.mubr.f32.mxu0 0.0
      %1571 = vmatmul.mubr.f32.gmra.mxu0 %v733
      %v1572 = vpop.f32.mrf.mxu0
      %v1573 = vadd.f32 %v1471, %v1572
      %v1574 = vpop.f32.mrf.mxu0
      %1575 = vmatprep.mubr.f32.mxu0 0.0
      %1576 = vmatmul.mubr.f32.gmra.mxu0 %v736
      %v1577 = vpop.f32.mrf.mxu0
      %v1578 = vadd.f32 %v1471, %v1577
      %v1579 = vpop.f32.mrf.mxu0
      %1580 = vmatprep.mubr.f32.mxu0 0.0
      %1581 = vmatmul.mubr.f32.gmra.mxu0 %v739
      %v1582 = vpop.f32.mrf.mxu0
      %v1583 = vadd.f32 %v1471, %v1582
      %v1584 = vpop.f32.mrf.mxu0
      %1585 = vmatprep.mubr.f32.mxu0 0.0
      %1586 = vmatmul.mubr.f32.gmra.mxu0 %v742
      %v1587 = vpop.f32.mrf.mxu0
      %v1588 = vadd.f32 %v1471, %v1587
      %v1589 = vpop.f32.mrf.mxu0
      %1590 = vmatprep.mubr.f32.mxu0 0.0
      %1591 = vmatmul.mubr.f32.gmra.mxu0 %v745
      %v1592 = vpop.f32.mrf.mxu0
      %v1593 = vadd.f32 %v1471, %v1592
      %v1594 = vpop.f32.mrf.mxu0
      %1595 = vmatprep.mubr.f32.mxu0 0.0
      %1596 = vmatmul.mubr.f32.gmra.mxu0 %v748
      %v1597 = vpop.f32.mrf.mxu0
      %v1598 = vadd.f32 %v1471, %v1597
      %v1599 = vpop.f32.mrf.mxu0
      %1600 = vmatprep.mubr.f32.mxu0 0.0
      %1601 = vmatmul.mubr.f32.gmra.mxu0 %v751
      %v1602 = vpop.f32.mrf.mxu0
      %v1603 = vadd.f32 %v1471, %v1602
      %v1604 = vpop.f32.mrf.mxu0
      %1605 = vmatprep.mubr.f32.mxu0 0.0
      %1606 = vmatmul.mubr.f32.gmra.mxu0 %v754
      %v1607 = vpop.f32.mrf.mxu0
      %v1608 = vadd.f32 %v1471, %v1607
      %v1609 = vpop.f32.mrf.mxu0
      %1610 = vmatprep.mubr.f32.mxu0 0.0
      %1611 = vmatmul.mubr.f32.gmra.mxu0 %v757
      %v1612 = vpop.f32.mrf.mxu0
      %v1613 = vadd.f32 %v1471, %v1612
      %v1614 = vpop.f32.mrf.mxu0
      %1615 = vmatprep.mubr.f32.mxu0 0.0
      %1616 = vmatmul.mubr.f32.gmra.mxu0 %v760
      %v1617 = vpop.f32.mrf.mxu0
      %v1618 = vadd.f32 %v1471, %v1617
      %v1619 = vpop.f32.mrf.mxu0
      %1620 = vmatprep.mubr.f32.mxu0 0.0
      %1621 = vmatmul.mubr.f32.gmra.mxu0 %v763
      %v1622 = vpop.f32.mrf.mxu0
      %v1623 = vadd.f32 %v1471, %v1622
      %v1624 = vpop.f32.mrf.mxu0
      %1625 = vmatprep.mubr.f32.mxu0 0.0
      %1626 = vmatmul.mubr.f32.gmra.mxu0 %v766
      %v1627 = vpop.f32.mrf.mxu0
      %v1628 = vadd.f32 %v1471, %v1627
      %v1629 = vpop.f32.mrf.mxu0
      %1630 = vmatprep.mubr.f32.mxu0 0.0
      %1631 = vmatmul.mubr.f32.gmra.mxu0 %v769
      %v1632 = vpop.f32.mrf.mxu0
      %v1633 = vadd.f32 %v1471, %v1632
      %v1634 = vpop.f32.mrf.mxu0
      %1635 = vmatprep.mubr.f32.mxu0 0.0
      %1636 = vmatmul.mubr.f32.gmra.mxu0 %v772
      %v1637 = vpop.f32.mrf.mxu0
      %v1638 = vadd.f32 %v1471, %v1637
      %v1639 = vpop.f32.mrf.mxu0
      %1640 = vmatprep.mubr.f32.mxu0 0.0
      %1641 = vmatmul.mubr.f32.gmra.mxu0 %v775
      %v1642 = vpop.f32.mrf.mxu0
      %v1643 = vadd.f32 %v1471, %v1642
      %v1644 = vpop.f32.mrf.mxu0
      %1645 = vmatprep.mubr.f32.mxu0 0.0
      %1646 = vmatmul.mubr.f32.gmra.mxu0 %v778
      %v1647 = vpop.f32.mrf.mxu0
      %v1648 = vadd.f32 %v1471, %v1647
      %v1649 = vpop.f32.mrf.mxu0
      %1650 = vmatprep.mubr.f32.mxu0 0.0
      %1651 = vmatmul.mubr.f32.gmra.mxu0 %v781
      %v1652 = vpop.f32.mrf.mxu0
      %v1653 = vadd.f32 %v1471, %v1652
      %v1654 = vpop.f32.mrf.mxu0
      %1655 = vmatprep.mubr.f32.mxu0 0.0
      %1656 = vmatmul.mubr.f32.gmra.mxu0 %v784
      %v1657 = vpop.f32.mrf.mxu0
      %v1658 = vadd.f32 %v1471, %v1657
      %v1659 = vpop.f32.mrf.mxu0
      %1660 = vmatprep.mubr.f32.mxu0 0.0
      %1661 = vmatmul.mubr.f32.gmra.mxu0 %v787
      %v1662 = vpop.f32.mrf.mxu0
      %v1663 = vadd.f32 %v1471, %v1662
      %v1664 = vpop.f32.mrf.mxu0
      %1665 = vmatprep.mubr.f32.mxu0 0.0
      %1666 = vmatmul.mubr.f32.gmra.mxu0 %v790
      %v1667 = vpop.f32.mrf.mxu0
      %v1668 = vadd.f32 %v1471, %v1667
      %v1669 = vpop.f32.mrf.mxu0
      %1670 = vmatprep.mubr.f32.mxu0 0.0
      %1671 = vmatmul.mubr.f32.gmra.mxu0 %v793
      %v1672 = vpop.f32.mrf.mxu0
      %v1673 = vadd.f32 %v1471, %v1672
      %v1674 = vpop.f32.mrf.mxu0
      %1675 = vmatprep.mubr.f32.mxu0 0.0
      %1676 = vmatmul.mubr.f32.gmra.mxu0 %v796
      %v1677 = vpop.f32.mrf.mxu0
      %v1678 = vadd.f32 %v1471, %v1677
      %v1679 = vpop.f32.mrf.mxu0
      %1680 = vmatprep.mubr.f32.mxu0 0.0
      %1681 = vmatmul.mubr.f32.gmra.mxu0 %v799
      %v1682 = vpop.f32.mrf.mxu0
      %v1683 = vadd.f32 %v1471, %v1682
      %v1684 = vpop.f32.mrf.mxu0
      %1685 = vmatprep.mubr.f32.mxu0 0.0
      %1686 = vmatmul.mubr.f32.gmra.mxu0 %v802
      %v1687 = vpop.f32.mrf.mxu0
      %v1688 = vadd.f32 %v1471, %v1687
      %v1689 = vpop.f32.mrf.mxu0
      %1690 = vmatprep.mubr.f32.mxu0 0.0
      %1691 = vmatmul.mubr.f32.gmra.mxu0 %v805
      %v1692 = vpop.f32.mrf.mxu0
      %v1693 = vadd.f32 %v1471, %v1692
      %v1694 = vpop.f32.mrf.mxu0
      %1695 = vmatprep.mubr.f32.mxu0 0.0
      %1696 = vmatmul.mubr.f32.gmra.mxu0 %v808
      %v1697 = vpop.f32.mrf.mxu0
      %v1698 = vadd.f32 %v1471, %v1697
      %v1699 = vpop.f32.mrf.mxu0
      %1700 = vdwg.mxu0
      %v1701 = vmax.f32 %v1543, 0.0
      %v1702 = vmax.f32 %v1548, 0.0
      %v1703 = vmax.f32 %v1553, 0.0
      %v1704 = vmax.f32 %v1558, 0.0
      %v1705 = vmax.f32 %v1563, 0.0
      %v1706 = vmax.f32 %v1568, 0.0
      %v1707 = vmax.f32 %v1573, 0.0
      %v1708 = vmax.f32 %v1578, 0.0
      %v1709 = vmax.f32 %v1583, 0.0
      %v1710 = vmax.f32 %v1588, 0.0
      %v1711 = vmax.f32 %v1593, 0.0
      %v1712 = vmax.f32 %v1598, 0.0
      %v1713 = vmax.f32 %v1603, 0.0
      %v1714 = vmax.f32 %v1608, 0.0
      %v1715 = vmax.f32 %v1613, 0.0
      %v1716 = vmax.f32 %v1618, 0.0
      %v1717 = vmax.f32 %v1623, 0.0
      %v1718 = vmax.f32 %v1628, 0.0
      %v1719 = vmax.f32 %v1633, 0.0
      %v1720 = vmax.f32 %v1638, 0.0
      %v1721 = vmax.f32 %v1643, 0.0
      %v1722 = vmax.f32 %v1648, 0.0
      %v1723 = vmax.f32 %v1653, 0.0
      %v1724 = vmax.f32 %v1658, 0.0
      %v1725 = vmax.f32 %v1663, 0.0
      %v1726 = vmax.f32 %v1668, 0.0
      %v1727 = vmax.f32 %v1673, 0.0
      %v1728 = vmax.f32 %v1678, 0.0
      %v1729 = vmax.f32 %v1683, 0.0
      %v1730 = vmax.f32 %v1688, 0.0
      %v1731 = vmax.f32 %v1693, 0.0
      %v1732 = vmax.f32 %v1698, 0.0
      %v1733 = vld [vmem:[%s6] sm:$0xff]
      %v1734 = vld [vmem:[%s7] sm:$0x1]
      %v1736 = vlaneseq
      %v1737 = vshrl.u32 %v1736, 7
      %v1738 = vsub.s32 0, %v1737
      %v1739 = vrot.slane %v1734, %v1738
      %v1742 = vsel %vm351, %v1701, 0
      %v1745 = vsel %vm351, %v1702, 0
      %v1748 = vsel %vm351, %v1703, 0
      %v1751 = vsel %vm351, %v1704, 0
      %v1754 = vsel %vm351, %v1705, 0
      %v1757 = vsel %vm351, %v1706, 0
      %v1760 = vsel %vm351, %v1707, 0
      %v1763 = vsel %vm351, %v1708, 0
      %v1766 = vsel %vm351, %v1709, 0
      %v1769 = vsel %vm351, %v1710, 0
      %v1772 = vsel %vm351, %v1711, 0
      %v1775 = vsel %vm351, %v1712, 0
      %v1778 = vsel %vm351, %v1713, 0
      %v1781 = vsel %vm351, %v1714, 0
      %v1784 = vsel %vm351, %v1715, 0
      %v1787 = vsel %vm351, %v1716, 0
      %v1790 = vsel %vm351, %v1717, 0
      %v1793 = vsel %vm351, %v1718, 0
      %v1796 = vsel %vm351, %v1719, 0
      %v1799 = vsel %vm351, %v1720, 0
      %v1802 = vsel %vm351, %v1721, 0
      %v1805 = vsel %vm351, %v1722, 0
      %v1808 = vsel %vm351, %v1723, 0
      %v1811 = vsel %vm351, %v1724, 0
      %v1814 = vsel %vm351, %v1725, 0
      %v1817 = vsel %vm351, %v1726, 0
      %v1820 = vsel %vm351, %v1727, 0
      %v1823 = vsel %vm351, %v1728, 0
      %v1826 = vsel %vm351, %v1729, 0
      %v1829 = vsel %vm351, %v1730, 0
      %v1832 = vsel %vm351, %v1731, 0
      %v1835 = vsel %vm351, %v1732, 0
      %1837 = vmatprep.subr.mxu0 0.0
      %1838 = vmatpush1.msra.mxu0 0.0
      %1839 = vmatprep.subr.mxu0 0.0
      %1840 = vmatpush1.msra.mxu0 0.0
      %1841 = vmatprep.subr.mxu0 0.0
      %1842 = vmatpush1.msra.mxu0 0.0
      %1843 = vmatprep.subr.mxu0 0.0
      %1844 = vmatpush1.msra.mxu0 0.0
      %1845 = vmatprep.subr.mxu0 0.0
      %1846 = vmatpush1.msra.mxu0 0.0
      %1847 = vmatprep.subr.mxu0 0.0
      %1848 = vmatpush1.msra.mxu0 0.0
      %1849 = vmatprep.subr.mxu0 0.0
      %1850 = vmatpush1.msra.mxu0 0.0
      %1851 = vmatprep.subr.mxu0 0.0
      %1852 = vmatpush1.msra.mxu0 0.0
      %1853 = vmatprep.subr.mxu0 0.0
      %1854 = vmatpush1.msra.mxu0 0.0
      %1855 = vmatprep.subr.mxu0 0.0
      %1856 = vmatpush1.msra.mxu0 0.0
      %1857 = vmatprep.subr.mxu0 0.0
      %1858 = vmatpush1.msra.mxu0 0.0
      %1859 = vmatprep.subr.mxu0 0.0
      %1860 = vmatpush1.msra.mxu0 0.0
      %1861 = vmatprep.subr.mxu0 0.0
      %1862 = vmatpush1.msra.mxu0 0.0
      %1863 = vmatprep.subr.mxu0 0.0
      %1864 = vmatpush1.msra.mxu0 0.0
      %1865 = vmatprep.subr.mxu0 0.0
      %1866 = vmatpush1.msra.mxu0 0.0
      %1867 = vmatprep.subr.mxu0 0.0
      %1868 = vmatpush1.msra.mxu0 %v1733
      %1869 = vmatprep.subr.mxu0 0.0
      %1870 = vmatpush2.msra.mxu0 0.0
      %1871 = vmatprep.subr.mxu0 0.0
      %1872 = vmatpush2.msra.mxu0 0.0
      %1873 = vmatprep.subr.mxu0 0.0
      %1874 = vmatpush2.msra.mxu0 0.0
      %1875 = vmatprep.subr.mxu0 0.0
      %1876 = vmatpush2.msra.mxu0 0.0
      %1877 = vmatprep.subr.mxu0 0.0
      %1878 = vmatpush2.msra.mxu0 0.0
      %1879 = vmatprep.subr.mxu0 0.0
      %1880 = vmatpush2.msra.mxu0 0.0
      %1881 = vmatprep.subr.mxu0 0.0
      %1882 = vmatpush2.msra.mxu0 0.0
      %1883 = vmatprep.subr.mxu0 0.0
      %1884 = vmatpush2.msra.mxu0 0.0
      %1885 = vmatprep.subr.mxu0 0.0
      %1886 = vmatpush2.msra.mxu0 0.0
      %1887 = vmatprep.subr.mxu0 0.0
      %1888 = vmatpush2.msra.mxu0 0.0
      %1889 = vmatprep.subr.mxu0 0.0
      %1890 = vmatpush2.msra.mxu0 0.0
      %1891 = vmatprep.subr.mxu0 0.0
      %1892 = vmatpush2.msra.mxu0 0.0
      %1893 = vmatprep.subr.mxu0 0.0
      %1894 = vmatpush2.msra.mxu0 0.0
      %1895 = vmatprep.subr.mxu0 0.0
      %1896 = vmatpush2.msra.mxu0 0.0
      %1897 = vmatprep.subr.mxu0 0.0
      %1898 = vmatpush2.msra.mxu0 0.0
      %1899 = vmatprep.subr.mxu0 0.0
      %1900 = vmatpush2.msra.mxu0 0.0
      %1901 = vmatprep.mubr.f32.mxu0 0.0
      %1902 = vmatmul.mubr.f32.gmra.mxu0 %v1742
      %v1903 = vpop.f32.mrf.mxu0
      %v1904 = vadd.f32 %v1739, %v1903
      %v1905 = vpop.f32.mrf.mxu0
      %1906 = vmatprep.mubr.f32.mxu0 0.0
      %1907 = vmatmul.mubr.f32.gmra.mxu0 %v1745
      %v1908 = vpop.f32.mrf.mxu0
      %v1909 = vadd.f32 %v1739, %v1908
      %v1910 = vpop.f32.mrf.mxu0
      %1911 = vmatprep.mubr.f32.mxu0 0.0
      %1912 = vmatmul.mubr.f32.gmra.mxu0 %v1748
      %v1913 = vpop.f32.mrf.mxu0
      %v1914 = vadd.f32 %v1739, %v1913
      %v1915 = vpop.f32.mrf.mxu0
      %1916 = vmatprep.mubr.f32.mxu0 0.0
      %1917 = vmatmul.mubr.f32.gmra.mxu0 %v1751
      %v1918 = vpop.f32.mrf.mxu0
      %v1919 = vadd.f32 %v1739, %v1918
      %v1920 = vpop.f32.mrf.mxu0
      %1921 = vmatprep.mubr.f32.mxu0 0.0
      %1922 = vmatmul.mubr.f32.gmra.mxu0 %v1754
      %v1923 = vpop.f32.mrf.mxu0
      %v1924 = vadd.f32 %v1739, %v1923
      %v1925 = vpop.f32.mrf.mxu0
      %1926 = vmatprep.mubr.f32.mxu0 0.0
      %1927 = vmatmul.mubr.f32.gmra.mxu0 %v1757
      %v1928 = vpop.f32.mrf.mxu0
      %v1929 = vadd.f32 %v1739, %v1928
      %v1930 = vpop.f32.mrf.mxu0
      %1931 = vmatprep.mubr.f32.mxu0 0.0
      %1932 = vmatmul.mubr.f32.gmra.mxu0 %v1760
      %v1933 = vpop.f32.mrf.mxu0
      %v1934 = vadd.f32 %v1739, %v1933
      %v1935 = vpop.f32.mrf.mxu0
      %1936 = vmatprep.mubr.f32.mxu0 0.0
      %1937 = vmatmul.mubr.f32.gmra.mxu0 %v1763
      %v1938 = vpop.f32.mrf.mxu0
      %v1939 = vadd.f32 %v1739, %v1938
      %v1940 = vpop.f32.mrf.mxu0
      %1941 = vmatprep.mubr.f32.mxu0 0.0
      %1942 = vmatmul.mubr.f32.gmra.mxu0 %v1766
      %v1943 = vpop.f32.mrf.mxu0
      %v1944 = vadd.f32 %v1739, %v1943
      %v1945 = vpop.f32.mrf.mxu0
      %1946 = vmatprep.mubr.f32.mxu0 0.0
      %1947 = vmatmul.mubr.f32.gmra.mxu0 %v1769
      %v1948 = vpop.f32.mrf.mxu0
      %v1949 = vadd.f32 %v1739, %v1948
      %v1950 = vpop.f32.mrf.mxu0
      %1951 = vmatprep.mubr.f32.mxu0 0.0
      %1952 = vmatmul.mubr.f32.gmra.mxu0 %v1772
      %v1953 = vpop.f32.mrf.mxu0
      %v1954 = vadd.f32 %v1739, %v1953
      %v1955 = vpop.f32.mrf.mxu0
      %1956 = vmatprep.mubr.f32.mxu0 0.0
      %1957 = vmatmul.mubr.f32.gmra.mxu0 %v1775
      %v1958 = vpop.f32.mrf.mxu0
      %v1959 = vadd.f32 %v1739, %v1958
      %v1960 = vpop.f32.mrf.mxu0
      %1961 = vmatprep.mubr.f32.mxu0 0.0
      %1962 = vmatmul.mubr.f32.gmra.mxu0 %v1778
      %v1963 = vpop.f32.mrf.mxu0
      %v1964 = vadd.f32 %v1739, %v1963
      %v1965 = vpop.f32.mrf.mxu0
      %1966 = vmatprep.mubr.f32.mxu0 0.0
      %1967 = vmatmul.mubr.f32.gmra.mxu0 %v1781
      %v1968 = vpop.f32.mrf.mxu0
      %v1969 = vadd.f32 %v1739, %v1968
      %v1970 = vpop.f32.mrf.mxu0
      %1971 = vmatprep.mubr.f32.mxu0 0.0
      %1972 = vmatmul.mubr.f32.gmra.mxu0 %v1784
      %v1973 = vpop.f32.mrf.mxu0
      %v1974 = vadd.f32 %v1739, %v1973
      %v1975 = vpop.f32.mrf.mxu0
      %1976 = vmatprep.mubr.f32.mxu0 0.0
      %1977 = vmatmul.mubr.f32.gmra.mxu0 %v1787
      %v1978 = vpop.f32.mrf.mxu0
      %v1979 = vadd.f32 %v1739, %v1978
      %v1980 = vpop.f32.mrf.mxu0
      %1981 = vmatprep.mubr.f32.mxu0 0.0
      %1982 = vmatmul.mubr.f32.gmra.mxu0 %v1790
      %v1983 = vpop.f32.mrf.mxu0
      %v1984 = vadd.f32 %v1739, %v1983
      %v1985 = vpop.f32.mrf.mxu0
      %1986 = vmatprep.mubr.f32.mxu0 0.0
      %1987 = vmatmul.mubr.f32.gmra.mxu0 %v1793
      %v1988 = vpop.f32.mrf.mxu0
      %v1989 = vadd.f32 %v1739, %v1988
      %v1990 = vpop.f32.mrf.mxu0
      %1991 = vmatprep.mubr.f32.mxu0 0.0
      %1992 = vmatmul.mubr.f32.gmra.mxu0 %v1796
      %v1993 = vpop.f32.mrf.mxu0
      %v1994 = vadd.f32 %v1739, %v1993
      %v1995 = vpop.f32.mrf.mxu0
      %1996 = vmatprep.mubr.f32.mxu0 0.0
      %1997 = vmatmul.mubr.f32.gmra.mxu0 %v1799
      %v1998 = vpop.f32.mrf.mxu0
      %v1999 = vadd.f32 %v1739, %v1998
      %v2000 = vpop.f32.mrf.mxu0
      %2001 = vmatprep.mubr.f32.mxu0 0.0
      %2002 = vmatmul.mubr.f32.gmra.mxu0 %v1802
      %v2003 = vpop.f32.mrf.mxu0
      %v2004 = vadd.f32 %v1739, %v2003
      %v2005 = vpop.f32.mrf.mxu0
      %2006 = vmatprep.mubr.f32.mxu0 0.0
      %2007 = vmatmul.mubr.f32.gmra.mxu0 %v1805
      %v2008 = vpop.f32.mrf.mxu0
      %v2009 = vadd.f32 %v1739, %v2008
      %v2010 = vpop.f32.mrf.mxu0
      %2011 = vmatprep.mubr.f32.mxu0 0.0
      %2012 = vmatmul.mubr.f32.gmra.mxu0 %v1808
      %v2013 = vpop.f32.mrf.mxu0
      %v2014 = vadd.f32 %v1739, %v2013
      %v2015 = vpop.f32.mrf.mxu0
      %2016 = vmatprep.mubr.f32.mxu0 0.0
      %2017 = vmatmul.mubr.f32.gmra.mxu0 %v1811
      %v2018 = vpop.f32.mrf.mxu0
      %v2019 = vadd.f32 %v1739, %v2018
      %v2020 = vpop.f32.mrf.mxu0
      %2021 = vmatprep.mubr.f32.mxu0 0.0
      %2022 = vmatmul.mubr.f32.gmra.mxu0 %v1814
      %v2023 = vpop.f32.mrf.mxu0
      %v2024 = vadd.f32 %v1739, %v2023
      %v2025 = vpop.f32.mrf.mxu0
      %2026 = vmatprep.mubr.f32.mxu0 0.0
      %2027 = vmatmul.mubr.f32.gmra.mxu0 %v1817
      %v2028 = vpop.f32.mrf.mxu0
      %v2029 = vadd.f32 %v1739, %v2028
      %v2030 = vpop.f32.mrf.mxu0
      %2031 = vmatprep.mubr.f32.mxu0 0.0
      %2032 = vmatmul.mubr.f32.gmra.mxu0 %v1820
      %v2033 = vpop.f32.mrf.mxu0
      %v2034 = vadd.f32 %v1739, %v2033
      %v2035 = vpop.f32.mrf.mxu0
      %2036 = vmatprep.mubr.f32.mxu0 0.0
      %2037 = vmatmul.mubr.f32.gmra.mxu0 %v1823
      %v2038 = vpop.f32.mrf.mxu0
      %v2039 = vadd.f32 %v1739, %v2038
      %v2040 = vpop.f32.mrf.mxu0
      %2041 = vmatprep.mubr.f32.mxu0 0.0
      %2042 = vmatmul.mubr.f32.gmra.mxu0 %v1826
      %v2043 = vpop.f32.mrf.mxu0
      %v2044 = vadd.f32 %v1739, %v2043
      %v2045 = vpop.f32.mrf.mxu0
      %2046 = vmatprep.mubr.f32.mxu0 0.0
      %2047 = vmatmul.mubr.f32.gmra.mxu0 %v1829
      %v2048 = vpop.f32.mrf.mxu0
      %v2049 = vadd.f32 %v1739, %v2048
      %v2050 = vpop.f32.mrf.mxu0
      %2051 = vmatprep.mubr.f32.mxu0 0.0
      %2052 = vmatmul.mubr.f32.gmra.mxu0 %v1832
      %v2053 = vpop.f32.mrf.mxu0
      %v2054 = vadd.f32 %v1739, %v2053
      %v2055 = vpop.f32.mrf.mxu0
      %2056 = vmatprep.mubr.f32.mxu0 0.0
      %2057 = vmatmul.mubr.f32.gmra.mxu0 %v1835
      %v2058 = vpop.f32.mrf.mxu0
      %v2059 = vadd.f32 %v1739, %v2058
      %v2060 = vpop.f32.mrf.mxu0
      %2061 = vdwg.mxu0
      %v2062 = vmax.f32 %v1904, 0.0
      %v2063 = vmax.f32 %v1909, 0.0
      %v2064 = vmax.f32 %v1914, 0.0
      %v2065 = vmax.f32 %v1919, 0.0
      %v2066 = vmax.f32 %v1924, 0.0
      %v2067 = vmax.f32 %v1929, 0.0
      %v2068 = vmax.f32 %v1934, 0.0
      %v2069 = vmax.f32 %v1939, 0.0
      %v2070 = vmax.f32 %v1944, 0.0
      %v2071 = vmax.f32 %v1949, 0.0
      %v2072 = vmax.f32 %v1954, 0.0
      %v2073 = vmax.f32 %v1959, 0.0
      %v2074 = vmax.f32 %v1964, 0.0
      %v2075 = vmax.f32 %v1969, 0.0
      %v2076 = vmax.f32 %v1974, 0.0
      %v2077 = vmax.f32 %v1979, 0.0
      %v2078 = vmax.f32 %v1984, 0.0
      %v2079 = vmax.f32 %v1989, 0.0
      %v2080 = vmax.f32 %v1994, 0.0
      %v2081 = vmax.f32 %v1999, 0.0
      %v2082 = vmax.f32 %v2004, 0.0
      %v2083 = vmax.f32 %v2009, 0.0
      %v2084 = vmax.f32 %v2014, 0.0
      %v2085 = vmax.f32 %v2019, 0.0
      %v2086 = vmax.f32 %v2024, 0.0
      %v2087 = vmax.f32 %v2029, 0.0
      %v2088 = vmax.f32 %v2034, 0.0
      %v2089 = vmax.f32 %v2039, 0.0
      %v2090 = vmax.f32 %v2044, 0.0
      %v2091 = vmax.f32 %v2049, 0.0
      %v2092 = vmax.f32 %v2054, 0.0
      %v2093 = vmax.f32 %v2059, 0.0
      %s2094 = scalar_lea.vmem %s309, 16
      %2095 = vst.msk [vmem:[%s2094] sm:$0xff] %vm1432, %v2062
      %2096 = vst.msk [vmem:[%s2094 + $0x8] sm:$0xff] %vm1432, %v2063
      %2097 = vst.msk [vmem:[%s2094 + $0x20] sm:$0xff] %vm1432, %v2064
      %2098 = vst.msk [vmem:[%s2094 + $0x28] sm:$0xff] %vm1432, %v2065
      %2099 = vst.msk [vmem:[%s2094 + $0x40] sm:$0xff] %vm1432, %v2066
      %2100 = vst.msk [vmem:[%s2094 + $0x48] sm:$0xff] %vm1432, %v2067
      %2101 = vst.msk [vmem:[%s2094 + $0x60] sm:$0xff] %vm1432, %v2068
      %2102 = vst.msk [vmem:[%s2094 + $0x68] sm:$0xff] %vm1432, %v2069
      %2103 = vst.msk [vmem:[%s2094 + $0x80] sm:$0xff] %vm1432, %v2070
      %2104 = vst.msk [vmem:[%s2094 + $0x88] sm:$0xff] %vm1432, %v2071
      %2105 = vst.msk [vmem:[%s2094 + $0xa0] sm:$0xff] %vm1432, %v2072
      %2106 = vst.msk [vmem:[%s2094 + $0xa8] sm:$0xff] %vm1432, %v2073
      %2107 = vst.msk [vmem:[%s2094 + $0xc0] sm:$0xff] %vm1432, %v2074
      %2108 = vst.msk [vmem:[%s2094 + $0xc8] sm:$0xff] %vm1432, %v2075
      %2109 = vst.msk [vmem:[%s2094 + $0xe0] sm:$0xff] %vm1432, %v2076
      %2110 = vst.msk [vmem:[%s2094 + $0xe8] sm:$0xff] %vm1432, %v2077
      %2111 = vst.msk [vmem:[%s2094 + $0x100] sm:$0xff] %vm1432, %v2078
      %2112 = vst.msk [vmem:[%s2094 + $0x108] sm:$0xff] %vm1432, %v2079
      %2113 = vst.msk [vmem:[%s2094 + $0x120] sm:$0xff] %vm1432, %v2080
      %2114 = vst.msk [vmem:[%s2094 + $0x128] sm:$0xff] %vm1432, %v2081
      %2115 = vst.msk [vmem:[%s2094 + $0x140] sm:$0xff] %vm1432, %v2082
      %2116 = vst.msk [vmem:[%s2094 + $0x148] sm:$0xff] %vm1432, %v2083
      %2117 = vst.msk [vmem:[%s2094 + $0x160] sm:$0xff] %vm1432, %v2084
      %2118 = vst.msk [vmem:[%s2094 + $0x168] sm:$0xff] %vm1432, %v2085
      %2119 = vst.msk [vmem:[%s2094 + $0x180] sm:$0xff] %vm1432, %v2086
      %2120 = vst.msk [vmem:[%s2094 + $0x188] sm:$0xff] %vm1432, %v2087
      %2121 = vst.msk [vmem:[%s2094 + $0x1a0] sm:$0xff] %vm1432, %v2088
      %2122 = vst.msk [vmem:[%s2094 + $0x1a8] sm:$0xff] %vm1432, %v2089
      %2123 = vst.msk [vmem:[%s2094 + $0x1c0] sm:$0xff] %vm1432, %v2090
      %2124 = vst.msk [vmem:[%s2094 + $0x1c8] sm:$0xff] %vm1432, %v2091
      %2125 = vst.msk [vmem:[%s2094 + $0x1e0] sm:$0xff] %vm1432, %v2092
      %2126 = vst.msk [vmem:[%s2094 + $0x1e8] sm:$0xff] %vm1432, %v2093
      %s2127 = smul.u32 16, %s19
      %p2128 = scmp.lt.s32.totalorder %s2127, 31
      %s2129 = scalar_select %p2128, %s2127, 31
      %s2130 = smul.addr %s2129, 4
      %s2131 = smul.addr %s2130, 8
      %s2132 = scalar_lea.vmem %s8, %s2131
      // Predicated region
      $region53: #{tpu_custom_call.1} parent=51 // pred_check
        %p2133 = pneg %p210
      $region54: #{tpu_custom_call.1} parent=51 // pred_check_branch
        %2135 = sbr.rel (%p2133) target = $region56
      $region55: #{tpu_custom_call.1} parent=51 // pred_region
        %s2136 = smul.u32 16, %s19
      $region56: #{tpu_custom_call.1} parent=51 // pred_fallthru
        _
    $region52: #{tpu_custom_call.1} parent=5 // pred_fallthru
      _
    %p2137 = scmp.le.s32.totalorder 2, %s14
    // Predicated region
    $region57: #{tpu_custom_call.1} parent=5 // pred_check
      %p2138 = pneg %p2137
    $region58: #{tpu_custom_call.1} parent=5 // pred_check_branch
      %2140 = sbr.rel (%p2138) target = $region60
    $region59: #{tpu_custom_call.1} parent=5 // pred_region
      %s2141 = ssub.s32 %s14, 2
      // Predicated region
      $region61: #{tpu_custom_call.1} parent=59 // pred_check
        %p2142 = pneg %p216
      $region62: #{tpu_custom_call.1} parent=59 // pred_check_branch
        %2144 = sbr.rel (%p2142) target = $region64
      $region63: #{tpu_custom_call.1} parent=59 // pred_region
        %s2145 = smul.u32 16, %s20
        %p2146 = scmp.lt.s32.totalorder %s2145, 31
        %s2147 = scalar_select %p2146, %s2145, 31
        %s2148 = smul.addr %s2147, 4
        %s2149 = smul.addr %s2148, 8
        %s2150 = scalar_lea.vmem %s8, %s2149
      $region64: #{tpu_custom_call.1} parent=59 // pred_fallthru
        _
    $region60: #{tpu_custom_call.1} parent=5 // pred_fallthru
      _
  $region6: #{tpu_custom_call.1} parent=0 // loop_footer
    %s18 = sadd.s32 1, %s14
  $region7: #{tpu_custom_call.1} parent=0 // loop_footer_branch
    %13 = sbr.rel target = $region3
  $region8: #{tpu_custom_call.1} parent=0 // loop_exit
    _

</llo_original>
